<compile_context>
chip_gen: v7x
topology: tpu7x:2x2x1
jax: 0.10.0
libtpu: 0.0.40
codegen_flags: <defaults>
</compile_context>

<pallas_src>
import functools

import jax
import jax.numpy as jnp
import numpy as np
from jax import lax
from jax.experimental import pallas as pl
from jax.experimental.pallas import tpu as pltpu


# ----------------------------- dense (GEMM) kernel -----------------------------
def _dense_kernel(x_ref, w_ref, b_ref, o_ref):
    o_ref[...] = (jnp.dot(x_ref[...], w_ref[...],
                          preferred_element_type=jnp.float32) + b_ref[...])


def dense(x, w_t, bias, *, col_block=1024):
    """x: (M, K) f32; w_t: (K, N) f32; bias: (1, N) f32 -> (M, N) f32.

    Column-tiled in lane-dense multiples of 128 (grid axis "parallel") so a
    vocab-sized FC weight is streamed tile by tile.
    """
    # TODO(synk): for v6e/v7x production, cast MXU operands to bf16 (keep
    # preferred_element_type=f32); kept f32 for exact parity with the f32
    # PyTorch reference.
    M, K = x.shape
    N = w_t.shape[1]
    if N % 128 == 0 and N > col_block:
        tn = col_block
        while N % tn:
            tn //= 2
    else:
        tn = N  # small / non-128-multiple N (demo sizes): single tile
    return pl.pallas_call(
        _dense_kernel,
        out_shape=jax.ShapeDtypeStruct((M, N), jnp.float32),
        grid_spec=pltpu.PrefetchScalarGridSpec(
            num_scalar_prefetch=0,
            grid=(N // tn,),
            in_specs=[
                pl.BlockSpec((M, K), lambda j: (0, 0)),
                pl.BlockSpec((K, tn), lambda j: (0, j)),
                pl.BlockSpec((1, tn), lambda j: (0, j)),
            ],
            out_specs=pl.BlockSpec((M, tn), lambda j: (0, j)),
        ),
        compiler_params=pltpu.CompilerParams(
            dimension_semantics=("parallel",)),
    )(x, w_t, bias)


# --------------------------- fused LSTM layer kernel ----------------------------
def _lstm_layer_kernel(x_ref, wih_ref, whh_ref, b_ref, y_ref,
                       h_sc, c_sc, gx_sc, *,
                       hidden_dim, batch, time_block, last_only):
    """One grid step = `time_block` LSTM timesteps of one layer.

    x_ref  : (tb*B, in)   time-major input rows for this time block
    wih_ref: (in, 4H)     grid-invariant
    whh_ref: (H, 4H)      grid-invariant
    b_ref  : (1, 4H)      b_ih + b_hh, grid-invariant
    y_ref  : (tb*B, H) full-sequence output, or (B, H) if last_only
    h_sc/c_sc: (B, H)     VMEM state carried across grid iterations
    gx_sc  : (tb*B, 4H)   per-block input projection scratch
    """
    H = hidden_dim
    B = batch
    blk = pl.program_id(0)

    @pl.when(blk == 0)
    def _():
        h_sc[...] = jnp.zeros_like(h_sc)
        c_sc[...] = jnp.zeros_like(c_sc)

    # Hoisted: one VMEM load reused by every unrolled step.
    whh = whh_ref[...]

    # Block input projection: independent of the recurrence, done once per
    # time block on the MXU (bias folded in).  Only h @ W_hh remains on the
    # serial critical path below.
    gx_sc[...] = (jnp.dot(x_ref[...], wih_ref[...],
                          preferred_element_type=jnp.float32) + b_ref[...])

    if H % 128 != 0:
        # Sub-128-lane gates (e.g. H=32): run the nonlinearities once over the
        # lane-dense (B, 4H) vreg and select tanh on the g-gate lanes instead
        # of four masked narrow EUP passes.  Mask is hoisted out of the loop.
        lane = lax.broadcasted_iota(jnp.int32, (B, 4 * H), 1)
        g_lane = (lane >= 2 * H) & (lane < 3 * H)

    def step(i, carry):
        h = h_sc[...]
        c = c_sc[...]
        gates = (gx_sc[pl.ds(i * B, B), :]
                 + jnp.dot(h, whh, preferred_element_type=jnp.float32))
        if H % 128 == 0:
            # lane-aligned slices: four narrow passes, each lane-dense
            i_g = jax.nn.sigmoid(gates[:, 0 * H:1 * H])
            f_g = jax.nn.sigmoid(gates[:, 1 * H:2 * H])
            g_g = jnp.tanh(gates[:, 2 * H:3 * H])
            o_g = jax.nn.sigmoid(gates[:, 3 * H:4 * H])
        else:
            act = jnp.where(g_lane, jnp.tanh(gates), jax.nn.sigmoid(gates))
            i_g = act[:, 0 * H:1 * H]
            f_g = act[:, 1 * H:2 * H]
            g_g = act[:, 2 * H:3 * H]
            o_g = act[:, 3 * H:4 * H]
        c_new = f_g * c + i_g * g_g
        h_new = o_g * jnp.tanh(c_new)
        h_sc[...] = h_new
        c_sc[...] = c_new
        if not last_only:
            y_ref[pl.ds(i * B, B), :] = h_new.astype(y_ref.dtype)
        return carry

    lax.fori_loop(0, time_block, step, None, unroll=True)

    if last_only:
        # Only the final hidden state is consumed downstream: skip the
        # (T-1)/T of the HBM writeback a full-sequence output would cost.
        @pl.when(blk == pl.num_programs(0) - 1)
        def _():
            y_ref[...] = h_sc[...].astype(y_ref.dtype)


def _pick_time_block(T, B, requested):
    """Largest tb <= requested that divides T and keeps tb*B sublane-aligned."""
    for tb in range(max(1, min(requested, T)), 0, -1):
        if T % tb == 0 and (tb * B) % 8 == 0:
            return tb
    return T  # full-sequence block: block shape equals the full array dims


def lstm_layer(x2, wih_t, whh_t, bias, *, seq_len, batch, last_only,
               time_block=16):
    """x2: (T*B, in) f32 time-major rows -> (T*B, H), or (B, H) if last_only."""
    T, B = seq_len, batch
    TB, in_dim = x2.shape
    assert TB == T * B
    H = whh_t.shape[0]
    G = 4 * H
    tb = _pick_time_block(T, B, time_block)

    if last_only:
        out_shape = jax.ShapeDtypeStruct((B, H), jnp.float32)
        out_spec = pl.BlockSpec((B, H), lambda t: (0, 0))
    else:
        out_shape = jax.ShapeDtypeStruct((T * B, H), jnp.float32)
        out_spec = pl.BlockSpec((tb * B, H), lambda t: (t, 0))

    kernel = functools.partial(_lstm_layer_kernel, hidden_dim=H, batch=B,
                               time_block=tb, last_only=last_only)
    # TODO(synk): at realistic H, single-buffer the grid-invariant W_ih/W_hh
    # blocks (pipeline_mode=pl.Buffered(1)) and set vmem_limit_bytes for the
    # v7x 64 MiB budget.
    return pl.pallas_call(
        kernel,
        out_shape=out_shape,
        grid_spec=pltpu.PrefetchScalarGridSpec(
            num_scalar_prefetch=0,
            grid=(T // tb,),
            in_specs=[
                pl.BlockSpec((tb * B, in_dim), lambda t: (t, 0)),
                pl.BlockSpec((in_dim, G), lambda t: (0, 0)),
                pl.BlockSpec((H, G), lambda t: (0, 0)),
                pl.BlockSpec((1, G), lambda t: (0, 0)),
            ],
            out_specs=out_spec,
            scratch_shapes=[
                pltpu.VMEM((B, H), jnp.float32),
                pltpu.VMEM((B, H), jnp.float32),
                pltpu.VMEM((tb * B, G), jnp.float32),
            ],
        ),
        compiler_params=pltpu.CompilerParams(
            # the time axis carries the h/c recurrence -> strictly sequential
            dimension_semantics=("arbitrary",)),
    )(x2, wih_t, whh_t, bias)


# ------------------------------- Full forward ----------------------------------
def lstm_model_forward(token_ids, params, *, time_block=16):
    # Embedding lookup is a data-dependent gather -> plain JAX glue.  Indexing
    # with the transposed id matrix produces the time-major layout directly;
    # the (T, B, E) -> (T*B, E) reshape is a contiguous no-op at the HBM level.
    B, T = token_ids.shape
    emb = params["embedding"][token_ids.T]          # (T, B, E)
    x = emb.reshape(T * B, emb.shape[-1])           # (T*B, E) time-major rows
    n_layers = len(params["lstm"])
    for li, layer in enumerate(params["lstm"]):
        x = lstm_layer(x, layer["wih_t"], layer["whh_t"], layer["bias"],
                       seq_len=T, batch=B,
                       last_only=(li == n_layers - 1),
                       time_block=time_block)
    # x is now the final-timestep hidden state (B, H) == lstm_out[:, -1, :]
    return dense(x, params["fc_w_t"], params["fc_b"])


# ------------------------------ Reference (JAX) --------------------------------
def lstm_model_reference(token_ids, params):
    emb = params["embedding"][token_ids]            # (B, T, E)
    x = jnp.transpose(emb, (1, 0, 2))               # (T, B, E)
    for layer in params["lstm"]:
        H = layer["whh_t"].shape[0]

        def step(carry, x_t, layer=layer, H=H):
            h, c = carry
            gates = x_t @ layer["wih_t"] + h @ layer["whh_t"] + layer["bias"][0]
            i = jax.nn.sigmoid(gates[:, 0 * H:1 * H])
            f = jax.nn.sigmoid(gates[:, 1 * H:2 * H])
            g = jnp.tanh(gates[:, 2 * H:3 * H])
            o = jax.nn.sigmoid(gates[:, 3 * H:4 * H])
            c = f * c + i * g
            h = o * jnp.tanh(c)
            return (h, c), h

        B = x.shape[1]
        init = (jnp.zeros((B, H), jnp.float32), jnp.zeros((B, H), jnp.float32))
        _, x = jax.lax.scan(step, init, x)
    return x[-1] @ params["fc_w_t"] + params["fc_b"][0]


# ----------------------------- Parameter building ------------------------------
def init_params(key, vocab_size, embedding_dim, hidden_dim, num_layers):
    keys = jax.random.split(key, 3 + 4 * num_layers)
    k_emb, k_fc_w, k_fc_b = keys[0], keys[1], keys[2]
    s = 1.0 / np.sqrt(hidden_dim)

    params = {
        "embedding": jax.random.normal(
            k_emb, (vocab_size, embedding_dim), jnp.float32),
        "lstm": [],
        # fc stored pre-transposed: (H, V)
        "fc_w_t": jax.random.uniform(
            k_fc_w, (hidden_dim, vocab_size), jnp.float32, -s, s),
        "fc_b": jax.random.uniform(
            k_fc_b, (1, vocab_size), jnp.float32, -s, s),
    }
    for l in range(num_layers):
        in_dim = embedding_dim if l == 0 else hidden_dim
        k0, k1, k2, k3 = keys[3 + 4 * l: 3 + 4 * (l + 1)]
        # PyTorch shapes: W_ih (4H, in), W_hh (4H, H), b_ih/b_hh (4H,)
        wih = jax.random.uniform(k0, (4 * hidden_dim, in_dim), jnp.float32, -s, s)
        whh = jax.random.uniform(k1, (4 * hidden_dim, hidden_dim), jnp.float32, -s, s)
        b_ih = jax.random.uniform(k2, (4 * hidden_dim,), jnp.float32, -s, s)
        b_hh = jax.random.uniform(k3, (4 * hidden_dim,), jnp.float32, -s, s)
        params["lstm"].append({
            "wih_t": wih.T,                         # (in, 4H)
            "whh_t": whh.T,                         # (H, 4H)
            "bias": (b_ih + b_hh)[None, :],         # (1, 4H)
        })
    return params


if __name__ == "__main__":
    VOCAB, EMB, HID, LAYERS = 64, 32, 32, 2
    B, T = 2, 8

    key = jax.random.PRNGKey(0)
    k_param, k_x = jax.random.split(key)
    params = init_params(k_param, VOCAB, EMB, HID, LAYERS)
    token_ids = jax.random.randint(k_x, (B, T), 0, VOCAB, dtype=jnp.int32)

    # time_block=4 -> two grid steps over T=8, exercising the VMEM h/c carry.
    fwd = jax.jit(functools.partial(lstm_model_forward, params=params,
                                    time_block=4))
    out = jax.block_until_ready(fwd(token_ids))

    ref = jax.block_until_ready(lstm_model_reference(token_ids, params))
    np.testing.assert_allclose(np.asarray(out), np.asarray(ref),
                               atol=1e-4, rtol=1e-4)
    assert out.shape == (B, VOCAB)
    print("KERNEL_OK")
</pallas_src>

<mosaic_0001>
module attributes {stable_mosaic.version = 11 : i64} {
  func.func @_dense_kernel(%arg0: i32, %arg1: memref<2x32xf32, #tpu.memory_space<vmem>>, %arg2: memref<32x64xf32, #tpu.memory_space<vmem>>, %arg3: memref<1x64xf32, #tpu.memory_space<vmem>>, %arg4: memref<2x64xf32, #tpu.memory_space<vmem>>) attributes {dimension_semantics = [#tpu.dimension_semantics<parallel>], iteration_bounds = array<i64: 1>, scalar_prefetch = 0 : i64, scratch_operands = 0 : i64, tpu.core_type = #tpu.core_type<tc>, window_params = [{pipeline_mode = #tpu.pipeline_mode<synchronous>, transform_indices = @transform_0, window_bounds = array<i64: 2, 32>}, {transform_indices = @transform_1, window_bounds = array<i64: 32, 64>}, {transform_indices = @transform_2, window_bounds = array<i64: 1, 64>}, {transform_indices = @transform_3, window_bounds = array<i64: 2, 64>}]} {
    %c0 = arith.constant 0 : index
    %c0_0 = arith.constant 0 : index
    %0 = vector.load %arg1[%c0, %c0_0] : memref<2x32xf32, #tpu.memory_space<vmem>>, vector<2x32xf32>
    %c0_1 = arith.constant 0 : index
    %c0_2 = arith.constant 0 : index
    %1 = vector.load %arg2[%c0_1, %c0_2] : memref<32x64xf32, #tpu.memory_space<vmem>>, vector<32x64xf32>
    %cst = arith.constant dense<0.000000e+00> : vector<2x64xf32>
    %2 = tpu.matmul %0, %1, %cst {dimension_numbers = #tpu.dot_dimension_numbers<[1], [0], [0], [1], [0, 0, 1, 1], [], []>} : vector<2x32xf32>, vector<32x64xf32>, vector<2x64xf32> -> vector<2x64xf32>
    %c0_3 = arith.constant 0 : index
    %c0_4 = arith.constant 0 : index
    %3 = vector.load %arg3[%c0_3, %c0_4] : memref<1x64xf32, #tpu.memory_space<vmem>>, vector<1x64xf32>
    %4 = vector.broadcast %3 : vector<1x64xf32> to vector<2x64xf32>
    %5 = arith.addf %2, %4 : vector<2x64xf32>
    %c0_5 = arith.constant 0 : index
    %c0_6 = arith.constant 0 : index
    %6 = vector.load %arg4[%c0_5, %c0_6] : memref<2x64xf32, #tpu.memory_space<vmem>>, vector<2x64xf32>
    tpu.vector_store %arg4[%c0_5, %c0_6], %5 {strides = array<i32>} : memref<2x64xf32, #tpu.memory_space<vmem>>, vector<2x64xf32>,
    return
  }
  func.func @transform_0(%arg0: i32) -> (i32, i32) {
    %c0_i32 = arith.constant 0 : i32
    %c0_i32_0 = arith.constant 0 : i32
    %c0_i32_1 = arith.constant 0 : i32
    return %c0_i32, %c0_i32_0 : i32, i32
  }
  func.func @transform_1(%arg0: i32) -> (i32, i32) {
    %c0_i32 = arith.constant 0 : i32
    %c0_i32_0 = arith.constant 0 : i32
    return %c0_i32, %arg0 : i32, i32
  }
  func.func @transform_2(%arg0: i32) -> (i32, i32) {
    %c0_i32 = arith.constant 0 : i32
    %c0_i32_0 = arith.constant 0 : i32
    return %c0_i32, %arg0 : i32, i32
  }
  func.func @transform_3(%arg0: i32) -> (i32, i32) {
    %c0_i32 = arith.constant 0 : i32
    %c0_i32_0 = arith.constant 0 : i32
    return %c0_i32, %arg0 : i32, i32
  }
}

module attributes {stable_mosaic.version = 11 : i64} {
  func.func @_lstm_layer_kernel(%arg0: i32, %arg1: memref<8x32xf32, #tpu.memory_space<vmem>>, %arg2: memref<32x128xf32, #tpu.memory_space<vmem>>, %arg3: memref<32x128xf32, #tpu.memory_space<vmem>>, %arg4: memref<1x128xf32, #tpu.memory_space<vmem>>, %arg5: memref<2x32xf32, #tpu.memory_space<vmem>>, %arg6: memref<2x32xf32, #tpu.memory_space<vmem>>, %arg7: memref<2x32xf32, #tpu.memory_space<vmem>>, %arg8: memref<8x128xf32, #tpu.memory_space<vmem>>) attributes {dimension_semantics = [#tpu.dimension_semantics<arbitrary>], iteration_bounds = array<i64: 2>, scalar_prefetch = 0 : i64, scratch_operands = 3 : i64, tpu.core_type = #tpu.core_type<tc>, window_params = [{transform_indices = @transform_0, window_bounds = array<i64: 8, 32>}, {pipeline_mode = #tpu.pipeline_mode<synchronous>, transform_indices = @transform_1, window_bounds = array<i64: 32, 128>}, {pipeline_mode = #tpu.pipeline_mode<synchronous>, transform_indices = @transform_2, window_bounds = array<i64: 32, 128>}, {pipeline_mode = #tpu.pipeline_mode<synchronous>, transform_indices = @transform_3, window_bounds = array<i64: 1, 128>}, {pipeline_mode = #tpu.pipeline_mode<synchronous>, transform_indices = @transform_4, window_bounds = array<i64: 2, 32>}]} {
    %c0_i32 = arith.constant 0 : i32
    %0 = arith.cmpi eq, %arg0, %c0_i32 : i32
    %1 = arith.extui %0 : i1 to i32
    %c0_i32_0 = arith.constant 0 : i32
    %2 = arith.cmpi ne, %1, %c0_i32_0 : i32
    scf.if %2 {
      %cst_61 = arith.constant 0.000000e+00 : f32
      %120 = vector.broadcast %cst_61 : f32 to vector<2x32xf32>
      %c0_62 = arith.constant 0 : index
      %c0_63 = arith.constant 0 : index
      %121 = vector.load %arg6[%c0_62, %c0_63] : memref<2x32xf32, #tpu.memory_space<vmem>>, vector<2x32xf32>
      tpu.vector_store %arg6[%c0_62, %c0_63], %120 {strides = array<i32>} : memref<2x32xf32, #tpu.memory_space<vmem>>, vector<2x32xf32>,
      %cst_64 = arith.constant 0.000000e+00 : f32
      %122 = vector.broadcast %cst_64 : f32 to vector<2x32xf32>
      %c0_65 = arith.constant 0 : index
      %c0_66 = arith.constant 0 : index
      %123 = vector.load %arg7[%c0_65, %c0_66] : memref<2x32xf32, #tpu.memory_space<vmem>>, vector<2x32xf32>
      tpu.vector_store %arg7[%c0_65, %c0_66], %122 {strides = array<i32>} : memref<2x32xf32, #tpu.memory_space<vmem>>, vector<2x32xf32>,
    } else {
    }
    %c0 = arith.constant 0 : index
    %c0_1 = arith.constant 0 : index
    %3 = vector.load %arg3[%c0, %c0_1] : memref<32x128xf32, #tpu.memory_space<vmem>>, vector<32x128xf32>
    %c0_2 = arith.constant 0 : index
    %c0_3 = arith.constant 0 : index
    %4 = vector.load %arg1[%c0_2, %c0_3] : memref<8x32xf32, #tpu.memory_space<vmem>>, vector<8x32xf32>
    %c0_4 = arith.constant 0 : index
    %c0_5 = arith.constant 0 : index
    %5 = vector.load %arg2[%c0_4, %c0_5] : memref<32x128xf32, #tpu.memory_space<vmem>>, vector<32x128xf32>
    %cst = arith.constant dense<0.000000e+00> : vector<8x128xf32>
    %6 = tpu.matmul %4, %5, %cst {dimension_numbers = #tpu.dot_dimension_numbers<[1], [0], [0], [1], [0, 0, 1, 1], [], []>} : vector<8x32xf32>, vector<32x128xf32>, vector<8x128xf32> -> vector<8x128xf32>
    %c0_6 = arith.constant 0 : index
    %c0_7 = arith.constant 0 : index
    %7 = vector.load %arg4[%c0_6, %c0_7] : memref<1x128xf32, #tpu.memory_space<vmem>>, vector<1x128xf32>
    %8 = vector.broadcast %7 : vector<1x128xf32> to vector<8x128xf32>
    %9 = arith.addf %6, %8 : vector<8x128xf32>
    %c0_8 = arith.constant 0 : index
    %c0_9 = arith.constant 0 : index
    %10 = vector.load %arg8[%c0_8, %c0_9] : memref<8x128xf32, #tpu.memory_space<vmem>>, vector<8x128xf32>
    tpu.vector_store %arg8[%c0_8, %c0_9], %9 {strides = array<i32>} : memref<8x128xf32, #tpu.memory_space<vmem>>, vector<8x128xf32>,
    %11 = tpu.iota {dimensions = array<i32: 1>} : vector<2x128xi32>
    %c64_i32 = arith.constant 64 : i32
    %12 = vector.broadcast %c64_i32 : i32 to vector<2x128xi32>
    %13 = arith.cmpi sge, %11, %12 : vector<2x128xi32>
    %c96_i32 = arith.constant 96 : i32
    %14 = vector.broadcast %c96_i32 : i32 to vector<2x128xi32>
    %15 = arith.cmpi slt, %11, %14 : vector<2x128xi32>
    %16 = arith.andi %13, %15 : vector<2x128xi1>
    %c0_i32_10 = arith.constant 0 : i32
    %c0_11 = arith.constant 0 : index
    %c0_12 = arith.constant 0 : index
    %17 = vector.load %arg6[%c0_11, %c0_12] : memref<2x32xf32, #tpu.memory_space<vmem>>, vector<2x32xf32>
    %c0_13 = arith.constant 0 : index
    %c0_14 = arith.constant 0 : index
    %18 = vector.load %arg7[%c0_13, %c0_14] : memref<2x32xf32, #tpu.memory_space<vmem>>, vector<2x32xf32>
    %c2_i32 = arith.constant 2 : i32
    %19 = arith.muli %c0_i32_10, %c2_i32 : i32
    %20 = arith.index_cast %19 : i32 to index
    %c0_15 = arith.constant 0 : index
    %21 = vector.load %arg8[%20, %c0_15] : memref<8x128xf32, #tpu.memory_space<vmem>>, vector<2x128xf32>
    %cst_16 = arith.constant dense<0.000000e+00> : vector<2x128xf32>
    %22 = tpu.matmul %17, %3, %cst_16 {dimension_numbers = #tpu.dot_dimension_numbers<[1], [0], [0], [1], [0, 0, 1, 1], [], []>} : vector<2x32xf32>, vector<32x128xf32>, vector<2x128xf32> -> vector<2x128xf32>
    %23 = arith.addf %21, %22 : vector<2x128xf32>
    %24 = math.tanh %23 : vector<2x128xf32>
    %25 = arith.negf %23 : vector<2x128xf32>
    %26 = math.exp %25 : vector<2x128xf32>
    %cst_17 = arith.constant 1.000000e+00 : f32
    %27 = vector.broadcast %cst_17 : f32 to vector<2x128xf32>
    %28 = arith.addf %27, %26 : vector<2x128xf32>
    %29 = arith.divf %27, %28 : vector<2x128xf32>
    %30 = arith.select %16, %24, %29 : vector<2x128xi1>, vector<2x128xf32>
    %31 = vector.extract_strided_slice %30 {offsets = [0, 0], sizes = [2, 32], strides = [1, 1]} : vector<2x128xf32> to vector<2x32xf32>
    %32 = vector.extract_strided_slice %30 {offsets = [0, 32], sizes = [2, 32], strides = [1, 1]} : vector<2x128xf32> to vector<2x32xf32>
    %33 = vector.extract_strided_slice %30 {offsets = [0, 64], sizes = [2, 32], strides = [1, 1]} : vector<2x128xf32> to vector<2x32xf32>
    %34 = vector.extract_strided_slice %30 {offsets = [0, 96], sizes = [2, 32], strides = [1, 1]} : vector<2x128xf32> to vector<2x32xf32>
    %35 = arith.mulf %32, %18 : vector<2x32xf32>
    %36 = arith.mulf %31, %33 : vector<2x32xf32>
    %37 = arith.addf %35, %36 : vector<2x32xf32>
    %38 = math.tanh %37 : vector<2x32xf32>
    %39 = arith.mulf %34, %38 : vector<2x32xf32>
    %c0_18 = arith.constant 0 : index
    %c0_19 = arith.constant 0 : index
    %40 = vector.load %arg6[%c0_18, %c0_19] : memref<2x32xf32, #tpu.memory_space<vmem>>, vector<2x32xf32>
    tpu.vector_store %arg6[%c0_18, %c0_19], %39 {strides = array<i32>} : memref<2x32xf32, #tpu.memory_space<vmem>>, vector<2x32xf32>,
    %c0_20 = arith.constant 0 : index
    %c0_21 = arith.constant 0 : index
    %41 = vector.load %arg7[%c0_20, %c0_21] : memref<2x32xf32, #tpu.memory_space<vmem>>, vector<2x32xf32>
    tpu.vector_store %arg7[%c0_20, %c0_21], %37 {strides = array<i32>} : memref<2x32xf32, #tpu.memory_space<vmem>>, vector<2x32xf32>,
    %c1_i32 = arith.constant 1 : i32
    %c0_22 = arith.constant 0 : index
    %c0_23 = arith.constant 0 : index
    %42 = vector.load %arg6[%c0_22, %c0_23] : memref<2x32xf32, #tpu.memory_space<vmem>>, vector<2x32xf32>
    %c0_24 = arith.constant 0 : index
    %c0_25 = arith.constant 0 : index
    %43 = vector.load %arg7[%c0_24, %c0_25] : memref<2x32xf32, #tpu.memory_space<vmem>>, vector<2x32xf32>
    %c2_i32_26 = arith.constant 2 : i32
    %44 = arith.muli %c1_i32, %c2_i32_26 : i32
    %45 = arith.index_cast %44 : i32 to index
    %c0_27 = arith.constant 0 : index
    %46 = vector.load %arg8[%45, %c0_27] : memref<8x128xf32, #tpu.memory_space<vmem>>, vector<2x128xf32>
    %cst_28 = arith.constant dense<0.000000e+00> : vector<2x128xf32>
    %47 = tpu.matmul %42, %3, %cst_28 {dimension_numbers = #tpu.dot_dimension_numbers<[1], [0], [0], [1], [0, 0, 1, 1], [], []>} : vector<2x32xf32>, vector<32x128xf32>, vector<2x128xf32> -> vector<2x128xf32>
    %48 = arith.addf %46, %47 : vector<2x128xf32>
    %49 = math.tanh %48 : vector<2x128xf32>
    %50 = arith.negf %48 : vector<2x128xf32>
    %51 = math.exp %50 : vector<2x128xf32>
    %cst_29 = arith.constant 1.000000e+00 : f32
    %52 = vector.broadcast %cst_29 : f32 to vector<2x128xf32>
    %53 = arith.addf %52, %51 : vector<2x128xf32>
    %54 = arith.divf %52, %53 : vector<2x128xf32>
    %55 = arith.select %16, %49, %54 : vector<2x128xi1>, vector<2x128xf32>
    %56 = vector.extract_strided_slice %55 {offsets = [0, 0], sizes = [2, 32], strides = [1, 1]} : vector<2x128xf32> to vector<2x32xf32>
    %57 = vector.extract_strided_slice %55 {offsets = [0, 32], sizes = [2, 32], strides = [1, 1]} : vector<2x128xf32> to vector<2x32xf32>
    %58 = vector.extract_strided_slice %55 {offsets = [0, 64], sizes = [2, 32], strides = [1, 1]} : vector<2x128xf32> to vector<2x32xf32>
    %59 = vector.extract_strided_slice %55 {offsets = [0, 96], sizes = [2, 32], strides = [1, 1]} : vector<2x128xf32> to vector<2x32xf32>
    %60 = arith.mulf %57, %43 : vector<2x32xf32>
    %61 = arith.mulf %56, %58 : vector<2x32xf32>
    %62 = arith.addf %60, %61 : vector<2x32xf32>
    %63 = math.tanh %62 : vector<2x32xf32>
    %64 = arith.mulf %59, %63 : vector<2x32xf32>
    %c0_30 = arith.constant 0 : index
    %c0_31 = arith.constant 0 : index
    %65 = vector.load %arg6[%c0_30, %c0_31] : memref<2x32xf32, #tpu.memory_space<vmem>>, vector<2x32xf32>
    tpu.vector_store %arg6[%c0_30, %c0_31], %64 {strides = array<i32>} : memref<2x32xf32, #tpu.memory_space<vmem>>, vector<2x32xf32>,
    %c0_32 = arith.constant 0 : index
    %c0_33 = arith.constant 0 : index
    %66 = vector.load %arg7[%c0_32, %c0_33] : memref<2x32xf32, #tpu.memory_space<vmem>>, vector<2x32xf32>
    tpu.vector_store %arg7[%c0_32, %c0_33], %62 {strides = array<i32>} : memref<2x32xf32, #tpu.memory_space<vmem>>, vector<2x32xf32>,
    %c2_i32_34 = arith.constant 2 : i32
    %c0_35 = arith.constant 0 : index
    %c0_36 = arith.constant 0 : index
    %67 = vector.load %arg6[%c0_35, %c0_36] : memref<2x32xf32, #tpu.memory_space<vmem>>, vector<2x32xf32>
    %c0_37 = arith.constant 0 : index
    %c0_38 = arith.constant 0 : index
    %68 = vector.load %arg7[%c0_37, %c0_38] : memref<2x32xf32, #tpu.memory_space<vmem>>, vector<2x32xf32>
    %c2_i32_39 = arith.constant 2 : i32
    %69 = arith.muli %c2_i32_34, %c2_i32_39 : i32
    %70 = arith.index_cast %69 : i32 to index
    %c0_40 = arith.constant 0 : index
    %71 = vector.load %arg8[%70, %c0_40] : memref<8x128xf32, #tpu.memory_space<vmem>>, vector<2x128xf32>
    %cst_41 = arith.constant dense<0.000000e+00> : vector<2x128xf32>
    %72 = tpu.matmul %67, %3, %cst_41 {dimension_numbers = #tpu.dot_dimension_numbers<[1], [0], [0], [1], [0, 0, 1, 1], [], []>} : vector<2x32xf32>, vector<32x128xf32>, vector<2x128xf32> -> vector<2x128xf32>
    %73 = arith.addf %71, %72 : vector<2x128xf32>
    %74 = math.tanh %73 : vector<2x128xf32>
    %75 = arith.negf %73 : vector<2x128xf32>
    %76 = math.exp %75 : vector<2x128xf32>
    %cst_42 = arith.constant 1.000000e+00 : f32
    %77 = vector.broadcast %cst_42 : f32 to vector<2x128xf32>
    %78 = arith.addf %77, %76 : vector<2x128xf32>
    %79 = arith.divf %77, %78 : vector<2x128xf32>
    %80 = arith.select %16, %74, %79 : vector<2x128xi1>, vector<2x128xf32>
    %81 = vector.extract_strided_slice %80 {offsets = [0, 0], sizes = [2, 32], strides = [1, 1]} : vector<2x128xf32> to vector<2x32xf32>
    %82 = vector.extract_strided_slice %80 {offsets = [0, 32], sizes = [2, 32], strides = [1, 1]} : vector<2x128xf32> to vector<2x32xf32>
    %83 = vector.extract_strided_slice %80 {offsets = [0, 64], sizes = [2, 32], strides = [1, 1]} : vector<2x128xf32> to vector<2x32xf32>
    %84 = vector.extract_strided_slice %80 {offsets = [0, 96], sizes = [2, 32], strides = [1, 1]} : vector<2x128xf32> to vector<2x32xf32>
    %85 = arith.mulf %82, %68 : vector<2x32xf32>
    %86 = arith.mulf %81, %83 : vector<2x32xf32>
    %87 = arith.addf %85, %86 : vector<2x32xf32>
    %88 = math.tanh %87 : vector<2x32xf32>
    %89 = arith.mulf %84, %88 : vector<2x32xf32>
    %c0_43 = arith.constant 0 : index
    %c0_44 = arith.constant 0 : index
    %90 = vector.load %arg6[%c0_43, %c0_44] : memref<2x32xf32, #tpu.memory_space<vmem>>, vector<2x32xf32>
    tpu.vector_store %arg6[%c0_43, %c0_44], %89 {strides = array<i32>} : memref<2x32xf32, #tpu.memory_space<vmem>>, vector<2x32xf32>,
    %c0_45 = arith.constant 0 : index
    %c0_46 = arith.constant 0 : index
    %91 = vector.load %arg7[%c0_45, %c0_46] : memref<2x32xf32, #tpu.memory_space<vmem>>, vector<2x32xf32>
    tpu.vector_store %arg7[%c0_45, %c0_46], %87 {strides = array<i32>} : memref<2x32xf32, #tpu.memory_space<vmem>>, vector<2x32xf32>,
    %c3_i32 = arith.constant 3 : i32
    %c0_47 = arith.constant 0 : index
    %c0_48 = arith.constant 0 : index
    %92 = vector.load %arg6[%c0_47, %c0_48] : memref<2x32xf32, #tpu.memory_space<vmem>>, vector<2x32xf32>
    %c0_49 = arith.constant 0 : index
    %c0_50 = arith.constant 0 : index
    %93 = vector.load %arg7[%c0_49, %c0_50] : memref<2x32xf32, #tpu.memory_space<vmem>>, vector<2x32xf32>
    %c2_i32_51 = arith.constant 2 : i32
    %94 = arith.muli %c3_i32, %c2_i32_51 : i32
    %95 = arith.index_cast %94 : i32 to index
    %c0_52 = arith.constant 0 : index
    %96 = vector.load %arg8[%95, %c0_52] : memref<8x128xf32, #tpu.memory_space<vmem>>, vector<2x128xf32>
    %cst_53 = arith.constant dense<0.000000e+00> : vector<2x128xf32>
    %97 = tpu.matmul %92, %3, %cst_53 {dimension_numbers = #tpu.dot_dimension_numbers<[1], [0], [0], [1], [0, 0, 1, 1], [], []>} : vector<2x32xf32>, vector<32x128xf32>, vector<2x128xf32> -> vector<2x128xf32>
    %98 = arith.addf %96, %97 : vector<2x128xf32>
    %99 = math.tanh %98 : vector<2x128xf32>
    %100 = arith.negf %98 : vector<2x128xf32>
    %101 = math.exp %100 : vector<2x128xf32>
    %cst_54 = arith.constant 1.000000e+00 : f32
    %102 = vector.broadcast %cst_54 : f32 to vector<2x128xf32>
    %103 = arith.addf %102, %101 : vector<2x128xf32>
    %104 = arith.divf %102, %103 : vector<2x128xf32>
    %105 = arith.select %16, %99, %104 : vector<2x128xi1>, vector<2x128xf32>
    %106 = vector.extract_strided_slice %105 {offsets = [0, 0], sizes = [2, 32], strides = [1, 1]} : vector<2x128xf32> to vector<2x32xf32>
    %107 = vector.extract_strided_slice %105 {offsets = [0, 32], sizes = [2, 32], strides = [1, 1]} : vector<2x128xf32> to vector<2x32xf32>
    %108 = vector.extract_strided_slice %105 {offsets = [0, 64], sizes = [2, 32], strides = [1, 1]} : vector<2x128xf32> to vector<2x32xf32>
    %109 = vector.extract_strided_slice %105 {offsets = [0, 96], sizes = [2, 32], strides = [1, 1]} : vector<2x128xf32> to vector<2x32xf32>
    %110 = arith.mulf %107, %93 : vector<2x32xf32>
    %111 = arith.mulf %106, %108 : vector<2x32xf32>
    %112 = arith.addf %110, %111 : vector<2x32xf32>
    %113 = math.tanh %112 : vector<2x32xf32>
    %114 = arith.mulf %109, %113 : vector<2x32xf32>
    %c0_55 = arith.constant 0 : index
    %c0_56 = arith.constant 0 : index
    %115 = vector.load %arg6[%c0_55, %c0_56] : memref<2x32xf32, #tpu.memory_space<vmem>>, vector<2x32xf32>
    tpu.vector_store %arg6[%c0_55, %c0_56], %114 {strides = array<i32>} : memref<2x32xf32, #tpu.memory_space<vmem>>, vector<2x32xf32>,
    %c0_57 = arith.constant 0 : index
    %c0_58 = arith.constant 0 : index
    %116 = vector.load %arg7[%c0_57, %c0_58] : memref<2x32xf32, #tpu.memory_space<vmem>>, vector<2x32xf32>
    tpu.vector_store %arg7[%c0_57, %c0_58], %112 {strides = array<i32>} : memref<2x32xf32, #tpu.memory_space<vmem>>, vector<2x32xf32>,
    %c4_i32 = arith.constant 4 : i32
    %c1_i32_59 = arith.constant 1 : i32
    %117 = arith.cmpi eq, %arg0, %c1_i32_59 : i32
    %118 = arith.extui %117 : i1 to i32
    %c0_i32_60 = arith.constant 0 : i32
    %119 = arith.cmpi ne, %118, %c0_i32_60 : i32
    scf.if %119 {
      %c0_61 = arith.constant 0 : index
      %c0_62 = arith.constant 0 : index
      %120 = vector.load %arg6[%c0_61, %c0_62] : memref<2x32xf32, #tpu.memory_space<vmem>>, vector<2x32xf32>
      %c0_63 = arith.constant 0 : index
      %c0_64 = arith.constant 0 : index
      %121 = vector.load %arg5[%c0_63, %c0_64] : memref<2x32xf32, #tpu.memory_space<vmem>>, vector<2x32xf32>
      tpu.vector_store %arg5[%c0_63, %c0_64], %120 {strides = array<i32>} : memref<2x32xf32, #tpu.memory_space<vmem>>, vector<2x32xf32>,
    } else {
    }
    return
  }
  func.func @transform_0(%arg0: i32) -> (i32, i32) {
    %c0_i32 = arith.constant 0 : i32
    %c0_i32_0 = arith.constant 0 : i32
    return %arg0, %c0_i32 : i32, i32
  }
  func.func @transform_1(%arg0: i32) -> (i32, i32) {
    %c0_i32 = arith.constant 0 : i32
    %c0_i32_0 = arith.constant 0 : i32
    %c0_i32_1 = arith.constant 0 : i32
    return %c0_i32, %c0_i32_0 : i32, i32
  }
  func.func @transform_2(%arg0: i32) -> (i32, i32) {
    %c0_i32 = arith.constant 0 : i32
    %c0_i32_0 = arith.constant 0 : i32
    %c0_i32_1 = arith.constant 0 : i32
    return %c0_i32, %c0_i32_0 : i32, i32
  }
  func.func @transform_3(%arg0: i32) -> (i32, i32) {
    %c0_i32 = arith.constant 0 : i32
    %c0_i32_0 = arith.constant 0 : i32
    %c0_i32_1 = arith.constant 0 : i32
    return %c0_i32, %c0_i32_0 : i32, i32
  }
  func.func @transform_4(%arg0: i32) -> (i32, i32) {
    %c0_i32 = arith.constant 0 : i32
    %c0_i32_0 = arith.constant 0 : i32
    %c0_i32_1 = arith.constant 0 : i32
    return %c0_i32, %c0_i32_0 : i32, i32
  }
}

module attributes {stable_mosaic.version = 11 : i64} {
  func.func @_lstm_layer_kernel(%arg0: i32, %arg1: memref<8x32xf32, #tpu.memory_space<vmem>>, %arg2: memref<32x128xf32, #tpu.memory_space<vmem>>, %arg3: memref<32x128xf32, #tpu.memory_space<vmem>>, %arg4: memref<1x128xf32, #tpu.memory_space<vmem>>, %arg5: memref<8x32xf32, #tpu.memory_space<vmem>>, %arg6: memref<2x32xf32, #tpu.memory_space<vmem>>, %arg7: memref<2x32xf32, #tpu.memory_space<vmem>>, %arg8: memref<8x128xf32, #tpu.memory_space<vmem>>) attributes {dimension_semantics = [#tpu.dimension_semantics<arbitrary>], iteration_bounds = array<i64: 2>, scalar_prefetch = 0 : i64, scratch_operands = 3 : i64, tpu.core_type = #tpu.core_type<tc>, window_params = [{transform_indices = @transform_0, window_bounds = array<i64: 8, 32>}, {pipeline_mode = #tpu.pipeline_mode<synchronous>, transform_indices = @transform_1, window_bounds = array<i64: 32, 128>}, {pipeline_mode = #tpu.pipeline_mode<synchronous>, transform_indices = @transform_2, window_bounds = array<i64: 32, 128>}, {pipeline_mode = #tpu.pipeline_mode<synchronous>, transform_indices = @transform_3, window_bounds = array<i64: 1, 128>}, {transform_indices = @transform_4, window_bounds = array<i64: 8, 32>}]} {
    %c0_i32 = arith.constant 0 : i32
    %0 = arith.cmpi eq, %arg0, %c0_i32 : i32
    %1 = arith.extui %0 : i1 to i32
    %c0_i32_0 = arith.constant 0 : i32
    %2 = arith.cmpi ne, %1, %c0_i32_0 : i32
    scf.if %2 {
      %cst_67 = arith.constant 0.000000e+00 : f32
      %129 = vector.broadcast %cst_67 : f32 to vector<2x32xf32>
      %c0_68 = arith.constant 0 : index
      %c0_69 = arith.constant 0 : index
      %130 = vector.load %arg6[%c0_68, %c0_69] : memref<2x32xf32, #tpu.memory_space<vmem>>, vector<2x32xf32>
      tpu.vector_store %arg6[%c0_68, %c0_69], %129 {strides = array<i32>} : memref<2x32xf32, #tpu.memory_space<vmem>>, vector<2x32xf32>,
      %cst_70 = arith.constant 0.000000e+00 : f32
      %131 = vector.broadcast %cst_70 : f32 to vector<2x32xf32>
      %c0_71 = arith.constant 0 : index
      %c0_72 = arith.constant 0 : index
      %132 = vector.load %arg7[%c0_71, %c0_72] : memref<2x32xf32, #tpu.memory_space<vmem>>, vector<2x32xf32>
      tpu.vector_store %arg7[%c0_71, %c0_72], %131 {strides = array<i32>} : memref<2x32xf32, #tpu.memory_space<vmem>>, vector<2x32xf32>,
    } else {
    }
    %c0 = arith.constant 0 : index
    %c0_1 = arith.constant 0 : index
    %3 = vector.load %arg3[%c0, %c0_1] : memref<32x128xf32, #tpu.memory_space<vmem>>, vector<32x128xf32>
    %c0_2 = arith.constant 0 : index
    %c0_3 = arith.constant 0 : index
    %4 = vector.load %arg1[%c0_2, %c0_3] : memref<8x32xf32, #tpu.memory_space<vmem>>, vector<8x32xf32>
    %c0_4 = arith.constant 0 : index
    %c0_5 = arith.constant 0 : index
    %5 = vector.load %arg2[%c0_4, %c0_5] : memref<32x128xf32, #tpu.memory_space<vmem>>, vector<32x128xf32>
    %cst = arith.constant dense<0.000000e+00> : vector<8x128xf32>
    %6 = tpu.matmul %4, %5, %cst {dimension_numbers = #tpu.dot_dimension_numbers<[1], [0], [0], [1], [0, 0, 1, 1], [], []>} : vector<8x32xf32>, vector<32x128xf32>, vector<8x128xf32> -> vector<8x128xf32>
    %c0_6 = arith.constant 0 : index
    %c0_7 = arith.constant 0 : index
    %7 = vector.load %arg4[%c0_6, %c0_7] : memref<1x128xf32, #tpu.memory_space<vmem>>, vector<1x128xf32>
    %8 = vector.broadcast %7 : vector<1x128xf32> to vector<8x128xf32>
    %9 = arith.addf %6, %8 : vector<8x128xf32>
    %c0_8 = arith.constant 0 : index
    %c0_9 = arith.constant 0 : index
    %10 = vector.load %arg8[%c0_8, %c0_9] : memref<8x128xf32, #tpu.memory_space<vmem>>, vector<8x128xf32>
    tpu.vector_store %arg8[%c0_8, %c0_9], %9 {strides = array<i32>} : memref<8x128xf32, #tpu.memory_space<vmem>>, vector<8x128xf32>,
    %11 = tpu.iota {dimensions = array<i32: 1>} : vector<2x128xi32>
    %c64_i32 = arith.constant 64 : i32
    %12 = vector.broadcast %c64_i32 : i32 to vector<2x128xi32>
    %13 = arith.cmpi sge, %11, %12 : vector<2x128xi32>
    %c96_i32 = arith.constant 96 : i32
    %14 = vector.broadcast %c96_i32 : i32 to vector<2x128xi32>
    %15 = arith.cmpi slt, %11, %14 : vector<2x128xi32>
    %16 = arith.andi %13, %15 : vector<2x128xi1>
    %c0_i32_10 = arith.constant 0 : i32
    %c0_11 = arith.constant 0 : index
    %c0_12 = arith.constant 0 : index
    %17 = vector.load %arg6[%c0_11, %c0_12] : memref<2x32xf32, #tpu.memory_space<vmem>>, vector<2x32xf32>
    %c0_13 = arith.constant 0 : index
    %c0_14 = arith.constant 0 : index
    %18 = vector.load %arg7[%c0_13, %c0_14] : memref<2x32xf32, #tpu.memory_space<vmem>>, vector<2x32xf32>
    %c2_i32 = arith.constant 2 : i32
    %19 = arith.muli %c0_i32_10, %c2_i32 : i32
    %20 = arith.index_cast %19 : i32 to index
    %c0_15 = arith.constant 0 : index
    %21 = vector.load %arg8[%20, %c0_15] : memref<8x128xf32, #tpu.memory_space<vmem>>, vector<2x128xf32>
    %cst_16 = arith.constant dense<0.000000e+00> : vector<2x128xf32>
    %22 = tpu.matmul %17, %3, %cst_16 {dimension_numbers = #tpu.dot_dimension_numbers<[1], [0], [0], [1], [0, 0, 1, 1], [], []>} : vector<2x32xf32>, vector<32x128xf32>, vector<2x128xf32> -> vector<2x128xf32>
    %23 = arith.addf %21, %22 : vector<2x128xf32>
    %24 = math.tanh %23 : vector<2x128xf32>
    %25 = arith.negf %23 : vector<2x128xf32>
    %26 = math.exp %25 : vector<2x128xf32>
    %cst_17 = arith.constant 1.000000e+00 : f32
    %27 = vector.broadcast %cst_17 : f32 to vector<2x128xf32>
    %28 = arith.addf %27, %26 : vector<2x128xf32>
    %29 = arith.divf %27, %28 : vector<2x128xf32>
    %30 = arith.select %16, %24, %29 : vector<2x128xi1>, vector<2x128xf32>
    %31 = vector.extract_strided_slice %30 {offsets = [0, 0], sizes = [2, 32], strides = [1, 1]} : vector<2x128xf32> to vector<2x32xf32>
    %32 = vector.extract_strided_slice %30 {offsets = [0, 32], sizes = [2, 32], strides = [1, 1]} : vector<2x128xf32> to vector<2x32xf32>
    %33 = vector.extract_strided_slice %30 {offsets = [0, 64], sizes = [2, 32], strides = [1, 1]} : vector<2x128xf32> to vector<2x32xf32>
    %34 = vector.extract_strided_slice %30 {offsets = [0, 96], sizes = [2, 32], strides = [1, 1]} : vector<2x128xf32> to vector<2x32xf32>
    %35 = arith.mulf %32, %18 : vector<2x32xf32>
    %36 = arith.mulf %31, %33 : vector<2x32xf32>
    %37 = arith.addf %35, %36 : vector<2x32xf32>
    %38 = math.tanh %37 : vector<2x32xf32>
    %39 = arith.mulf %34, %38 : vector<2x32xf32>
    %c0_18 = arith.constant 0 : index
    %c0_19 = arith.constant 0 : index
    %40 = vector.load %arg6[%c0_18, %c0_19] : memref<2x32xf32, #tpu.memory_space<vmem>>, vector<2x32xf32>
    tpu.vector_store %arg6[%c0_18, %c0_19], %39 {strides = array<i32>} : memref<2x32xf32, #tpu.memory_space<vmem>>, vector<2x32xf32>,
    %c0_20 = arith.constant 0 : index
    %c0_21 = arith.constant 0 : index
    %41 = vector.load %arg7[%c0_20, %c0_21] : memref<2x32xf32, #tpu.memory_space<vmem>>, vector<2x32xf32>
    tpu.vector_store %arg7[%c0_20, %c0_21], %37 {strides = array<i32>} : memref<2x32xf32, #tpu.memory_space<vmem>>, vector<2x32xf32>,
    %c2_i32_22 = arith.constant 2 : i32
    %42 = arith.muli %c0_i32_10, %c2_i32_22 : i32
    %43 = arith.index_cast %42 : i32 to index
    %c0_23 = arith.constant 0 : index
    %44 = vector.load %arg5[%43, %c0_23] : memref<8x32xf32, #tpu.memory_space<vmem>>, vector<2x32xf32>
    tpu.vector_store %arg5[%43, %c0_23], %39 {strides = array<i32>} : memref<8x32xf32, #tpu.memory_space<vmem>>, vector<2x32xf32>,
    %c1_i32 = arith.constant 1 : i32
    %c0_24 = arith.constant 0 : index
    %c0_25 = arith.constant 0 : index
    %45 = vector.load %arg6[%c0_24, %c0_25] : memref<2x32xf32, #tpu.memory_space<vmem>>, vector<2x32xf32>
    %c0_26 = arith.constant 0 : index
    %c0_27 = arith.constant 0 : index
    %46 = vector.load %arg7[%c0_26, %c0_27] : memref<2x32xf32, #tpu.memory_space<vmem>>, vector<2x32xf32>
    %c2_i32_28 = arith.constant 2 : i32
    %47 = arith.muli %c1_i32, %c2_i32_28 : i32
    %48 = arith.index_cast %47 : i32 to index
    %c0_29 = arith.constant 0 : index
    %49 = vector.load %arg8[%48, %c0_29] : memref<8x128xf32, #tpu.memory_space<vmem>>, vector<2x128xf32>
    %cst_30 = arith.constant dense<0.000000e+00> : vector<2x128xf32>
    %50 = tpu.matmul %45, %3, %cst_30 {dimension_numbers = #tpu.dot_dimension_numbers<[1], [0], [0], [1], [0, 0, 1, 1], [], []>} : vector<2x32xf32>, vector<32x128xf32>, vector<2x128xf32> -> vector<2x128xf32>
    %51 = arith.addf %49, %50 : vector<2x128xf32>
    %52 = math.tanh %51 : vector<2x128xf32>
    %53 = arith.negf %51 : vector<2x128xf32>
    %54 = math.exp %53 : vector<2x128xf32>
    %cst_31 = arith.constant 1.000000e+00 : f32
    %55 = vector.broadcast %cst_31 : f32 to vector<2x128xf32>
    %56 = arith.addf %55, %54 : vector<2x128xf32>
    %57 = arith.divf %55, %56 : vector<2x128xf32>
    %58 = arith.select %16, %52, %57 : vector<2x128xi1>, vector<2x128xf32>
    %59 = vector.extract_strided_slice %58 {offsets = [0, 0], sizes = [2, 32], strides = [1, 1]} : vector<2x128xf32> to vector<2x32xf32>
    %60 = vector.extract_strided_slice %58 {offsets = [0, 32], sizes = [2, 32], strides = [1, 1]} : vector<2x128xf32> to vector<2x32xf32>
    %61 = vector.extract_strided_slice %58 {offsets = [0, 64], sizes = [2, 32], strides = [1, 1]} : vector<2x128xf32> to vector<2x32xf32>
    %62 = vector.extract_strided_slice %58 {offsets = [0, 96], sizes = [2, 32], strides = [1, 1]} : vector<2x128xf32> to vector<2x32xf32>
    %63 = arith.mulf %60, %46 : vector<2x32xf32>
    %64 = arith.mulf %59, %61 : vector<2x32xf32>
    %65 = arith.addf %63, %64 : vector<2x32xf32>
    %66 = math.tanh %65 : vector<2x32xf32>
    %67 = arith.mulf %62, %66 : vector<2x32xf32>
    %c0_32 = arith.constant 0 : index
    %c0_33 = arith.constant 0 : index
    %68 = vector.load %arg6[%c0_32, %c0_33] : memref<2x32xf32, #tpu.memory_space<vmem>>, vector<2x32xf32>
    tpu.vector_store %arg6[%c0_32, %c0_33], %67 {strides = array<i32>} : memref<2x32xf32, #tpu.memory_space<vmem>>, vector<2x32xf32>,
    %c0_34 = arith.constant 0 : index
    %c0_35 = arith.constant 0 : index
    %69 = vector.load %arg7[%c0_34, %c0_35] : memref<2x32xf32, #tpu.memory_space<vmem>>, vector<2x32xf32>
    tpu.vector_store %arg7[%c0_34, %c0_35], %65 {strides = array<i32>} : memref<2x32xf32, #tpu.memory_space<vmem>>, vector<2x32xf32>,
    %c2_i32_36 = arith.constant 2 : i32
    %70 = arith.muli %c1_i32, %c2_i32_36 : i32
    %71 = arith.index_cast %70 : i32 to index
    %c0_37 = arith.constant 0 : index
    %72 = vector.load %arg5[%71, %c0_37] : memref<8x32xf32, #tpu.memory_space<vmem>>, vector<2x32xf32>
    tpu.vector_store %arg5[%71, %c0_37], %67 {strides = array<i32>} : memref<8x32xf32, #tpu.memory_space<vmem>>, vector<2x32xf32>,
    %c2_i32_38 = arith.constant 2 : i32
    %c0_39 = arith.constant 0 : index
    %c0_40 = arith.constant 0 : index
    %73 = vector.load %arg6[%c0_39, %c0_40] : memref<2x32xf32, #tpu.memory_space<vmem>>, vector<2x32xf32>
    %c0_41 = arith.constant 0 : index
    %c0_42 = arith.constant 0 : index
    %74 = vector.load %arg7[%c0_41, %c0_42] : memref<2x32xf32, #tpu.memory_space<vmem>>, vector<2x32xf32>
    %c2_i32_43 = arith.constant 2 : i32
    %75 = arith.muli %c2_i32_38, %c2_i32_43 : i32
    %76 = arith.index_cast %75 : i32 to index
    %c0_44 = arith.constant 0 : index
    %77 = vector.load %arg8[%76, %c0_44] : memref<8x128xf32, #tpu.memory_space<vmem>>, vector<2x128xf32>
    %cst_45 = arith.constant dense<0.000000e+00> : vector<2x128xf32>
    %78 = tpu.matmul %73, %3, %cst_45 {dimension_numbers = #tpu.dot_dimension_numbers<[1], [0], [0], [1], [0, 0, 1, 1], [], []>} : vector<2x32xf32>, vector<32x128xf32>, vector<2x128xf32> -> vector<2x128xf32>
    %79 = arith.addf %77, %78 : vector<2x128xf32>
    %80 = math.tanh %79 : vector<2x128xf32>
    %81 = arith.negf %79 : vector<2x128xf32>
    %82 = math.exp %81 : vector<2x128xf32>
    %cst_46 = arith.constant 1.000000e+00 : f32
    %83 = vector.broadcast %cst_46 : f32 to vector<2x128xf32>
    %84 = arith.addf %83, %82 : vector<2x128xf32>
    %85 = arith.divf %83, %84 : vector<2x128xf32>
    %86 = arith.select %16, %80, %85 : vector<2x128xi1>, vector<2x128xf32>
    %87 = vector.extract_strided_slice %86 {offsets = [0, 0], sizes = [2, 32], strides = [1, 1]} : vector<2x128xf32> to vector<2x32xf32>
    %88 = vector.extract_strided_slice %86 {offsets = [0, 32], sizes = [2, 32], strides = [1, 1]} : vector<2x128xf32> to vector<2x32xf32>
    %89 = vector.extract_strided_slice %86 {offsets = [0, 64], sizes = [2, 32], strides = [1, 1]} : vector<2x128xf32> to vector<2x32xf32>
    %90 = vector.extract_strided_slice %86 {offsets = [0, 96], sizes = [2, 32], strides = [1, 1]} : vector<2x128xf32> to vector<2x32xf32>
    %91 = arith.mulf %88, %74 : vector<2x32xf32>
    %92 = arith.mulf %87, %89 : vector<2x32xf32>
    %93 = arith.addf %91, %92 : vector<2x32xf32>
    %94 = math.tanh %93 : vector<2x32xf32>
    %95 = arith.mulf %90, %94 : vector<2x32xf32>
    %c0_47 = arith.constant 0 : index
    %c0_48 = arith.constant 0 : index
    %96 = vector.load %arg6[%c0_47, %c0_48] : memref<2x32xf32, #tpu.memory_space<vmem>>, vector<2x32xf32>
    tpu.vector_store %arg6[%c0_47, %c0_48], %95 {strides = array<i32>} : memref<2x32xf32, #tpu.memory_space<vmem>>, vector<2x32xf32>,
    %c0_49 = arith.constant 0 : index
    %c0_50 = arith.constant 0 : index
    %97 = vector.load %arg7[%c0_49, %c0_50] : memref<2x32xf32, #tpu.memory_space<vmem>>, vector<2x32xf32>
    tpu.vector_store %arg7[%c0_49, %c0_50], %93 {strides = array<i32>} : memref<2x32xf32, #tpu.memory_space<vmem>>, vector<2x32xf32>,
    %c2_i32_51 = arith.constant 2 : i32
    %98 = arith.muli %c2_i32_38, %c2_i32_51 : i32
    %99 = arith.index_cast %98 : i32 to index
    %c0_52 = arith.constant 0 : index
    %100 = vector.load %arg5[%99, %c0_52] : memref<8x32xf32, #tpu.memory_space<vmem>>, vector<2x32xf32>
    tpu.vector_store %arg5[%99, %c0_52], %95 {strides = array<i32>} : memref<8x32xf32, #tpu.memory_space<vmem>>, vector<2x32xf32>,
    %c3_i32 = arith.constant 3 : i32
    %c0_53 = arith.constant 0 : index
    %c0_54 = arith.constant 0 : index
    %101 = vector.load %arg6[%c0_53, %c0_54] : memref<2x32xf32, #tpu.memory_space<vmem>>, vector<2x32xf32>
    %c0_55 = arith.constant 0 : index
    %c0_56 = arith.constant 0 : index
    %102 = vector.load %arg7[%c0_55, %c0_56] : memref<2x32xf32, #tpu.memory_space<vmem>>, vector<2x32xf32>
    %c2_i32_57 = arith.constant 2 : i32
    %103 = arith.muli %c3_i32, %c2_i32_57 : i32
    %104 = arith.index_cast %103 : i32 to index
    %c0_58 = arith.constant 0 : index
    %105 = vector.load %arg8[%104, %c0_58] : memref<8x128xf32, #tpu.memory_space<vmem>>, vector<2x128xf32>
    %cst_59 = arith.constant dense<0.000000e+00> : vector<2x128xf32>
    %106 = tpu.matmul %101, %3, %cst_59 {dimension_numbers = #tpu.dot_dimension_numbers<[1], [0], [0], [1], [0, 0, 1, 1], [], []>} : vector<2x32xf32>, vector<32x128xf32>, vector<2x128xf32> -> vector<2x128xf32>
    %107 = arith.addf %105, %106 : vector<2x128xf32>
    %108 = math.tanh %107 : vector<2x128xf32>
    %109 = arith.negf %107 : vector<2x128xf32>
    %110 = math.exp %109 : vector<2x128xf32>
    %cst_60 = arith.constant 1.000000e+00 : f32
    %111 = vector.broadcast %cst_60 : f32 to vector<2x128xf32>
    %112 = arith.addf %111, %110 : vector<2x128xf32>
    %113 = arith.divf %111, %112 : vector<2x128xf32>
    %114 = arith.select %16, %108, %113 : vector<2x128xi1>, vector<2x128xf32>
    %115 = vector.extract_strided_slice %114 {offsets = [0, 0], sizes = [2, 32], strides = [1, 1]} : vector<2x128xf32> to vector<2x32xf32>
    %116 = vector.extract_strided_slice %114 {offsets = [0, 32], sizes = [2, 32], strides = [1, 1]} : vector<2x128xf32> to vector<2x32xf32>
    %117 = vector.extract_strided_slice %114 {offsets = [0, 64], sizes = [2, 32], strides = [1, 1]} : vector<2x128xf32> to vector<2x32xf32>
    %118 = vector.extract_strided_slice %114 {offsets = [0, 96], sizes = [2, 32], strides = [1, 1]} : vector<2x128xf32> to vector<2x32xf32>
    %119 = arith.mulf %116, %102 : vector<2x32xf32>
    %120 = arith.mulf %115, %117 : vector<2x32xf32>
    %121 = arith.addf %119, %120 : vector<2x32xf32>
    %122 = math.tanh %121 : vector<2x32xf32>
    %123 = arith.mulf %118, %122 : vector<2x32xf32>
    %c0_61 = arith.constant 0 : index
    %c0_62 = arith.constant 0 : index
    %124 = vector.load %arg6[%c0_61, %c0_62] : memref<2x32xf32, #tpu.memory_space<vmem>>, vector<2x32xf32>
    tpu.vector_store %arg6[%c0_61, %c0_62], %123 {strides = array<i32>} : memref<2x32xf32, #tpu.memory_space<vmem>>, vector<2x32xf32>,
    %c0_63 = arith.constant 0 : index
    %c0_64 = arith.constant 0 : index
    %125 = vector.load %arg7[%c0_63, %c0_64] : memref<2x32xf32, #tpu.memory_space<vmem>>, vector<2x32xf32>
    tpu.vector_store %arg7[%c0_63, %c0_64], %121 {strides = array<i32>} : memref<2x32xf32, #tpu.memory_space<vmem>>, vector<2x32xf32>,
    %c2_i32_65 = arith.constant 2 : i32
    %126 = arith.muli %c3_i32, %c2_i32_65 : i32
    %127 = arith.index_cast %126 : i32 to index
    %c0_66 = arith.constant 0 : index
    %128 = vector.load %arg5[%127, %c0_66] : memref<8x32xf32, #tpu.memory_space<vmem>>, vector<2x32xf32>
    tpu.vector_store %arg5[%127, %c0_66], %123 {strides = array<i32>} : memref<8x32xf32, #tpu.memory_space<vmem>>, vector<2x32xf32>,
    %c4_i32 = arith.constant 4 : i32
    return
  }
  func.func @transform_0(%arg0: i32) -> (i32, i32) {
    %c0_i32 = arith.constant 0 : i32
    %c0_i32_0 = arith.constant 0 : i32
    return %arg0, %c0_i32 : i32, i32
  }
  func.func @transform_1(%arg0: i32) -> (i32, i32) {
    %c0_i32 = arith.constant 0 : i32
    %c0_i32_0 = arith.constant 0 : i32
    %c0_i32_1 = arith.constant 0 : i32
    return %c0_i32, %c0_i32_0 : i32, i32
  }
  func.func @transform_2(%arg0: i32) -> (i32, i32) {
    %c0_i32 = arith.constant 0 : i32
    %c0_i32_0 = arith.constant 0 : i32
    %c0_i32_1 = arith.constant 0 : i32
    return %c0_i32, %c0_i32_0 : i32, i32
  }
  func.func @transform_3(%arg0: i32) -> (i32, i32) {
    %c0_i32 = arith.constant 0 : i32
    %c0_i32_0 = arith.constant 0 : i32
    %c0_i32_1 = arith.constant 0 : i32
    return %c0_i32, %c0_i32_0 : i32, i32
  }
  func.func @transform_4(%arg0: i32) -> (i32, i32) {
    %c0_i32 = arith.constant 0 : i32
    %c0_i32_0 = arith.constant 0 : i32
    return %arg0, %c0_i32 : i32, i32
  }
}

</mosaic_0001>

<llo_original>
// kernel: lstm_model_forward.5
$region0: #{lstm_model_forward.5}
  #allocation0 [shape = 'u32[]', space=smem, size = 0x4, offset = 0x4, fixed_abs, tag = 'smem constant byte address 0x4 - core index']
  #allocation1 [shape = 'u32[144,128]{1,0:T(1,128)}', space=vmem, size = 0x12000, scoped, tag = 'internal scratch']
  %s0 = inlined_call_operand.vmem [shape: f32[2,32], index: 0, kind: input, shape index: {}]
  %s1 = inlined_call_operand.vmem [shape: f32[32,64], index: 1, kind: input, shape index: {}]
  %s2 = inlined_call_operand.vmem [shape: f32[1,64], index: 2, kind: input, shape index: {}]
  %s3 = inlined_call_operand.hbm [shape: f32[2,64], index: 3, kind: output, shape index: {}]
  %s4 = sld [smem:[#allocation0]]
  $region22: #{lstm_model_forward.5} parent=0
    _
  %s6 = ssub.s32 1, %s4
  %s7 = scalar_select 0, %s6, %s4
  $region1: #{lstm_model_forward.5} parent=0
    #allocation2 [shape = 'u8[1024]{0}', space=vmem, size = 0x400, scoped, tag = 'output window, operand 0, single buffered']
    #allocation3 [shape = 's32[1]{0}', space=sflag, size = 0x4, scoped, tag = 'scoped memory for lstm_model_forward.5']
    %8 = vsyncpa [#allocation3], 0
    // Predicated region
    $region2: #{lstm_model_forward.5} parent=1 // pred_check
      _
    $region3: #{lstm_model_forward.5} parent=1 // pred_check_branch
      %10 = sbr.rel (0) target = $region5
    $region4: #{lstm_model_forward.5} parent=1 // pred_region
      _
    $region5: #{lstm_model_forward.5} parent=1 // pred_fallthru
      _
    // Predicated region
    $region6: #{lstm_model_forward.5} parent=1 // pred_check
      _
    $region7: #{lstm_model_forward.5} parent=1 // pred_check_branch
      %12 = sbr.rel (0) target = $region9
    $region8: #{lstm_model_forward.5} parent=1 // pred_region
      _
    $region9: #{lstm_model_forward.5} parent=1 // pred_fallthru
      _
    // Predicated region
    $region10: #{lstm_model_forward.5} parent=1 // pred_check
      _
    $region11: #{lstm_model_forward.5} parent=1 // pred_check_branch
      %14 = sbr.rel (0) target = $region13
    $region12: #{lstm_model_forward.5} parent=1 // pred_region
      _
    $region13: #{lstm_model_forward.5} parent=1 // pred_fallthru
      _
    %v15 = vld [vmem:[%s0] sm:$0x3]
    %v16 = vld [vmem:[%s1] sm:$0xff]
    %v17 = vld [vmem:[%s1 + $0x8] sm:$0xff]
    %v18 = vld [vmem:[%s1 + $0x10] sm:$0xff]
    %v19 = vld [vmem:[%s1 + $0x18] sm:$0xff]
    %v20 = vld [vmem:[%s2] sm:$0x1]
    %v22 = vlaneseq
    %v23 = vshrl.u32 %v22, 7
    %v24 = vsub.s32 0, %v23
    %v25 = vrot.slane %v20, %v24
    %vm27 = vcmask 261120
    %v29 = vsel %vm27, %v15, 0
    %31 = vmatprep.subr.mxu0 0.0
    %32 = vmatpush1.msra.mxu0 %v16
    %33 = vmatprep.subr.mxu0 0.0
    %34 = vmatpush1.msra.mxu0 %v17
    %35 = vmatprep.subr.mxu0 0.0
    %36 = vmatpush1.msra.mxu0 %v18
    %37 = vmatprep.subr.mxu0 0.0
    %38 = vmatpush1.msra.mxu0 %v19
    %39 = vmatprep.subr.mxu0 0.0
    %40 = vmatpush1.msra.mxu0 0.0
    %41 = vmatprep.subr.mxu0 0.0
    %42 = vmatpush1.msra.mxu0 0.0
    %43 = vmatprep.subr.mxu0 0.0
    %44 = vmatpush1.msra.mxu0 0.0
    %45 = vmatprep.subr.mxu0 0.0
    %46 = vmatpush1.msra.mxu0 0.0
    %47 = vmatprep.subr.mxu0 0.0
    %48 = vmatpush1.msra.mxu0 0.0
    %49 = vmatprep.subr.mxu0 0.0
    %50 = vmatpush1.msra.mxu0 0.0
    %51 = vmatprep.subr.mxu0 0.0
    %52 = vmatpush1.msra.mxu0 0.0
    %53 = vmatprep.subr.mxu0 0.0
    %54 = vmatpush1.msra.mxu0 0.0
    %55 = vmatprep.subr.mxu0 0.0
    %56 = vmatpush1.msra.mxu0 0.0
    %57 = vmatprep.subr.mxu0 0.0
    %58 = vmatpush1.msra.mxu0 0.0
    %59 = vmatprep.subr.mxu0 0.0
    %60 = vmatpush1.msra.mxu0 0.0
    %61 = vmatprep.subr.mxu0 0.0
    %62 = vmatpush1.msra.mxu0 0.0
    %63 = vmatprep.subr.mxu0 0.0
    %64 = vmatpush1.msra.mxu0 0.0
    %65 = vmatprep.subr.mxu0 0.0
    %66 = vmatpush1.msra.mxu0 0.0
    %67 = vmatprep.subr.mxu0 0.0
    %68 = vmatpush1.msra.mxu0 0.0
    %69 = vmatprep.subr.mxu0 0.0
    %70 = vmatpush1.msra.mxu0 0.0
    %71 = vmatprep.subr.mxu0 0.0
    %72 = vmatpush1.msra.mxu0 0.0
    %73 = vmatprep.subr.mxu0 0.0
    %74 = vmatpush1.msra.mxu0 0.0
    %75 = vmatprep.subr.mxu0 0.0
    %76 = vmatpush1.msra.mxu0 0.0
    %77 = vmatprep.subr.mxu0 0.0
    %78 = vmatpush1.msra.mxu0 0.0
    %79 = vmatprep.subr.mxu0 0.0
    %80 = vmatpush1.msra.mxu0 0.0
    %81 = vmatprep.subr.mxu0 0.0
    %82 = vmatpush1.msra.mxu0 0.0
    %83 = vmatprep.subr.mxu0 0.0
    %84 = vmatpush1.msra.mxu0 0.0
    %85 = vmatprep.subr.mxu0 0.0
    %86 = vmatpush1.msra.mxu0 0.0
    %87 = vmatprep.subr.mxu0 0.0
    %88 = vmatpush1.msra.mxu0 0.0
    %89 = vmatprep.subr.mxu0 0.0
    %90 = vmatpush1.msra.mxu0 0.0
    %91 = vmatprep.subr.mxu0 0.0
    %92 = vmatpush1.msra.mxu0 0.0
    %93 = vmatprep.subr.mxu0 0.0
    %94 = vmatpush1.msra.mxu0 0.0
    %95 = vmatprep.mubr.f32.mxu0 0.0
    %96 = vmatmul.mubr.f32.gmra.mrb[0].mxu0 %v29
    %v97 = vpop.f32.mrb[0].mxu0
    %v98 = vadd.f32 %v25, %v97
    %v99 = vpop.f32.mrb[0].mxu0
    %100 = vdwg.mxu0
    %vm101 = vcmask 517120
    %102 = vst.msk [vmem:[#allocation2] sm:$0x3] %vm101, %v98
    // Predicated region
    $region14: #{lstm_model_forward.5} parent=1 // pred_check
      _
    $region15: #{lstm_model_forward.5} parent=1 // pred_check_branch
      %104 = sbr.rel (0) target = $region17
    $region16: #{lstm_model_forward.5} parent=1 // pred_region
      %s106 = ssub.s32 32, 32
      %107 = vsyncadd [#allocation3], %s106
      %s109 = sshll.u32 [#allocation2], 4
      %s110 = int_to_ptr.vmem [resolvable:$true] %s109
      %112 = dma.vmem_to_hbm [thread:$0]  %s110, 32, %s3, [#allocation3]
    $region17: #{lstm_model_forward.5} parent=1 // pred_fallthru
      _
    // Predicated region
    $region18: #{lstm_model_forward.5} parent=1 // pred_check
      _
    $region19: #{lstm_model_forward.5} parent=1 // pred_check_branch
      %114 = sbr.rel (0) target = $region21
    $region20: #{lstm_model_forward.5} parent=1 // pred_region
      %115 = dma.done [#allocation3], 32
    $region21: #{lstm_model_forward.5} parent=1 // pred_fallthru
      _
    %116 = vsyncpa [#allocation3], 1

// kernel: lstm_model_forward.4
$region0: #{lstm_model_forward.4}
  #allocation0 [shape = 'u32[]', space=smem, size = 0x4, offset = 0x4, fixed_abs, tag = 'smem constant byte address 0x4 - core index']
  #allocation1 [shape = 'u32[144,128]{1,0:T(1,128)}', space=vmem, size = 0x12000, scoped, tag = 'internal scratch']
  #allocation2 [shape = 'f32[2,32]{1,0:T(2,128)}', space=vmem, size = 0x400, scoped, tag = 'scratch operand']
  #allocation3 [shape = 'f32[2,32]{1,0:T(2,128)}', space=vmem, size = 0x400, scoped, tag = 'scratch operand']
  #allocation4 [shape = 'f32[8,128]{1,0:T(8,128)}', space=vmem, size = 0x1000, scoped, tag = 'scratch operand']
  %s0 = inlined_call_operand.vmem [shape: f32[16,32], index: 0, kind: input, shape index: {}]
  %s1 = inlined_call_operand.vmem [shape: f32[32,128], index: 1, kind: input, shape index: {}]
  %s2 = inlined_call_operand.vmem [shape: f32[32,128], index: 2, kind: input, shape index: {}]
  %s3 = inlined_call_operand.vmem [shape: f32[1,128], index: 3, kind: input, shape index: {}]
  %s4 = inlined_call_operand.vmem [shape: f32[2,32], index: 4, kind: output, shape index: {}]
  %s5 = sld [smem:[#allocation0]]
  $region57: #{lstm_model_forward.4} parent=0
    _
  %s7 = ssub.s32 1, %s5
  %s8 = scalar_select 0, %s7, %s5
  loop: start=0, step=1, limit=4
  $region2: #{lstm_model_forward.4} parent=0 // loop_pre_header
    _
  $region3: #{lstm_model_forward.4} parent=0 // loop_header
    %s10 = sphi 0, %s14
    %p11 = scmp.ge.s32.totalorder %s10, 4
    %s20 = sphi 0, %s22
    %s23 = sphi 0, %s20
    %s24 = sphi 0, %s23
    %s40 = sphi 0, %s24
    %s44 = sphi 0, %s44
    %s46 = sphi 0, %s44
    %s47 = sphi 0, %s46
    %s61 = sphi 0, %s47
    %s65 = sphi 0, %s65
    %s67 = sphi 0, %s65
    %s68 = sphi 0, %s67
    %s82 = sphi 0, %s68
    %s86 = sphi 0, %s86
    %s88 = sphi 0, %s86
    %s89 = sphi 0, %s88
    %s103 = sphi 0, %s89
    %s107 = sphi 0, %s107
    %s109 = sphi 0, %s107
    %s110 = sphi 0, %s109
    %s124 = sphi 0, %s110
  $region4: #{lstm_model_forward.4} parent=0 // loop_header_branch
    %13 = sbr.rel (%p11) target = $region8
  $region5: #{lstm_model_forward.4} parent=0 // loop_body
    %s15 = ssub.s32 %s10, 1
    %s16 = ssub.s32 %s10, 2
    %s17 = sadd.s32 %s10, 1
    %s18 = ssub.s32 %s10, %s17
    %p19 = scmp.eq.s32.totalorder %s18, 0
    %s21 = sadd.s32 %s20, 1
    %s22 = scalar_select %p19, %s20, %s21
    %p25 = pneg %p19
    %p26 = scmp.eq.s32.totalorder %s10, 1
    %p27 = por %p25, %p26
    %p28 = scmp.ne.s32.totalorder %s20, %s23
    %p29 = scmp.eq.s32.totalorder %s10, 0
    %p30 = por %p28, %p29
    %p31 = scmp.ne.s32.totalorder %s20, %s23
    %p32 = scmp.eq.s32.totalorder %s15, 1
    %p33 = por %p31, %p32
    %p34 = scmp.ne.s32.totalorder %s23, %s24
    %p35 = scmp.eq.s32.totalorder %s15, 0
    %p36 = por %p34, %p35
    %p37 = scmp.ne.s32.totalorder %s23, %s24
    %p38 = scmp.eq.s32.totalorder %s16, 1
    %p39 = por %p37, %p38
    %p41 = scmp.ne.s32.totalorder %s24, %s40
    %p42 = scmp.eq.s32.totalorder %s16, 0
    %p43 = por %p41, %p42
    %s45 = sadd.s32 %s44, 1
    %p48 = scmp.eq.s32.totalorder %s10, 1
    %p49 = scmp.ne.s32.totalorder %s44, %s46
    %p50 = scmp.eq.s32.totalorder %s10, 0
    %p51 = por %p49, %p50
    %p52 = scmp.ne.s32.totalorder %s44, %s46
    %p53 = scmp.eq.s32.totalorder %s15, 1
    %p54 = por %p52, %p53
    %p55 = scmp.ne.s32.totalorder %s46, %s47
    %p56 = scmp.eq.s32.totalorder %s15, 0
    %p57 = por %p55, %p56
    %p58 = scmp.ne.s32.totalorder %s46, %s47
    %p59 = scmp.eq.s32.totalorder %s16, 1
    %p60 = por %p58, %p59
    %p62 = scmp.ne.s32.totalorder %s47, %s61
    %p63 = scmp.eq.s32.totalorder %s16, 0
    %p64 = por %p62, %p63
    %s66 = sadd.s32 %s65, 1
    %p69 = scmp.eq.s32.totalorder %s10, 1
    %p70 = scmp.ne.s32.totalorder %s65, %s67
    %p71 = scmp.eq.s32.totalorder %s10, 0
    %p72 = por %p70, %p71
    %p73 = scmp.ne.s32.totalorder %s65, %s67
    %p74 = scmp.eq.s32.totalorder %s15, 1
    %p75 = por %p73, %p74
    %p76 = scmp.ne.s32.totalorder %s67, %s68
    %p77 = scmp.eq.s32.totalorder %s15, 0
    %p78 = por %p76, %p77
    %p79 = scmp.ne.s32.totalorder %s67, %s68
    %p80 = scmp.eq.s32.totalorder %s16, 1
    %p81 = por %p79, %p80
    %p83 = scmp.ne.s32.totalorder %s68, %s82
    %p84 = scmp.eq.s32.totalorder %s16, 0
    %p85 = por %p83, %p84
    %s87 = sadd.s32 %s86, 1
    %p90 = scmp.eq.s32.totalorder %s10, 1
    %p91 = scmp.ne.s32.totalorder %s86, %s88
    %p92 = scmp.eq.s32.totalorder %s10, 0
    %p93 = por %p91, %p92
    %p94 = scmp.ne.s32.totalorder %s86, %s88
    %p95 = scmp.eq.s32.totalorder %s15, 1
    %p96 = por %p94, %p95
    %p97 = scmp.ne.s32.totalorder %s88, %s89
    %p98 = scmp.eq.s32.totalorder %s15, 0
    %p99 = por %p97, %p98
    %p100 = scmp.ne.s32.totalorder %s88, %s89
    %p101 = scmp.eq.s32.totalorder %s16, 1
    %p102 = por %p100, %p101
    %p104 = scmp.ne.s32.totalorder %s89, %s103
    %p105 = scmp.eq.s32.totalorder %s16, 0
    %p106 = por %p104, %p105
    %s108 = sadd.s32 %s107, 1
    %p111 = scmp.eq.s32.totalorder %s10, 1
    %p112 = scmp.ne.s32.totalorder %s107, %s109
    %p113 = scmp.eq.s32.totalorder %s10, 0
    %p114 = por %p112, %p113
    %p115 = scmp.ne.s32.totalorder %s107, %s109
    %p116 = scmp.eq.s32.totalorder %s15, 1
    %p117 = por %p115, %p116
    %p118 = scmp.ne.s32.totalorder %s109, %s110
    %p119 = scmp.eq.s32.totalorder %s15, 0
    %p120 = por %p118, %p119
    %p121 = scmp.ne.s32.totalorder %s109, %s110
    %p122 = scmp.eq.s32.totalorder %s16, 1
    %p123 = por %p121, %p122
    %p125 = scmp.ne.s32.totalorder %s110, %s124
    %p126 = scmp.eq.s32.totalorder %s16, 0
    %p127 = por %p125, %p126
    %p128 = scmp.le.s32.totalorder 1, %s10
    %p129 = scmp.lt.s32.totalorder %s10, 3
    %p130 = pnand %p128, %p129
    %p131 = pneg %p130
    // Predicated region
    $region9: #{lstm_model_forward.4} parent=5 // pred_check
      _
    $region10: #{lstm_model_forward.4} parent=5 // pred_check_branch
      %133 = sbr.rel (%p130) target = $region12
    $region11: #{lstm_model_forward.4} parent=5 // pred_region
      %s134 = ssub.s32 %s10, 1
      // Predicated region
      $region13: #{lstm_model_forward.4} parent=11 // pred_check
        %p135 = pneg %p57
      $region14: #{lstm_model_forward.4} parent=11 // pred_check_branch
        %137 = sbr.rel (%p135) target = $region16
      $region15: #{lstm_model_forward.4} parent=11 // pred_region
        _
      $region16: #{lstm_model_forward.4} parent=11 // pred_fallthru
        _
      // Predicated region
      $region17: #{lstm_model_forward.4} parent=11 // pred_check
        %p138 = pneg %p78
      $region18: #{lstm_model_forward.4} parent=11 // pred_check_branch
        %140 = sbr.rel (%p138) target = $region20
      $region19: #{lstm_model_forward.4} parent=11 // pred_region
        _
      $region20: #{lstm_model_forward.4} parent=11 // pred_fallthru
        _
      // Predicated region
      $region21: #{lstm_model_forward.4} parent=11 // pred_check
        %p141 = pneg %p99
      $region22: #{lstm_model_forward.4} parent=11 // pred_check_branch
        %143 = sbr.rel (%p141) target = $region24
      $region23: #{lstm_model_forward.4} parent=11 // pred_region
        _
      $region24: #{lstm_model_forward.4} parent=11 // pred_fallthru
        _
    $region12: #{lstm_model_forward.4} parent=5 // pred_fallthru
      _
    %p144 = scmp.lt.s32.totalorder %s10, 2
    // Predicated region
    $region25: #{lstm_model_forward.4} parent=5 // pred_check
      %p145 = pneg %p144
    $region26: #{lstm_model_forward.4} parent=5 // pred_check_branch
      %147 = sbr.rel (%p145) target = $region28
    $region27: #{lstm_model_forward.4} parent=5 // pred_region
      // Predicated region
      $region29: #{lstm_model_forward.4} parent=27 // pred_check
        %p148 = pneg %p30
      $region30: #{lstm_model_forward.4} parent=27 // pred_check_branch
        %150 = sbr.rel (%p148) target = $region32
      $region31: #{lstm_model_forward.4} parent=27 // pred_region
        %p151 = scmp.lt.s32.totalorder %s10, 1
        %s152 = scalar_select %p151, %s10, 1
        %s153 = smul.addr %s152, 8
        %s154 = scalar_lea.vmem %s0, %s153
      $region32: #{lstm_model_forward.4} parent=27 // pred_fallthru
        _
    $region28: #{lstm_model_forward.4} parent=5 // pred_fallthru
      _
    %p155 = scmp.le.s32.totalorder 1, %s10
    %p156 = scmp.lt.s32.totalorder %s10, 3
    %p157 = pnand %p155, %p156
    %p158 = pneg %p157
    // Predicated region
    $region33: #{lstm_model_forward.4} parent=5 // pred_check
      _
    $region34: #{lstm_model_forward.4} parent=5 // pred_check_branch
      %160 = sbr.rel (%p157) target = $region36
    $region35: #{lstm_model_forward.4} parent=5 // pred_region
      %s161 = ssub.s32 %s10, 1
      %p162 = scmp.lt.s32.totalorder %s15, 1
      %s163 = scalar_select %p162, %s15, 1
      %s164 = smul.addr %s163, 8
      %s165 = scalar_lea.vmem %s0, %s164
      %p166 = pneg %p36
      %p167 = pneg %p33
      %p168 = pneg %p57
      %p169 = pneg %p54
      %p170 = pneg %p78
      %p171 = pneg %p75
      %p172 = pneg %p99
      %p173 = pneg %p96
      %p174 = pneg %p120
      %p175 = pneg %p117
      %p176 = scmp.lt.s32.totalorder %s15, 1
      %s177 = scalar_select %p176, %s15, 1
      %s178 = smul.addr %s177, 8
      %s179 = scalar_lea.vmem %s0, %s178
      %p180 = scmp.eq.s32.totalorder %s15, 0
      // Predicated region
      $region37: #{lstm_model_forward.4} parent=35 // pred_check
        %p181 = pneg %p180
      $region38: #{lstm_model_forward.4} parent=35 // pred_check_branch
        %183 = sbr.rel (%p181) target = $region40
      $region39: #{lstm_model_forward.4} parent=35 // pred_region
        %vm184 = vcmask 254976
        %185 = vst.msk [vmem:[#allocation2] sm:$0x3] %vm184, 0.0
        %186 = vst.msk [vmem:[#allocation3] sm:$0x3] %vm184, 0.0
      $region40: #{lstm_model_forward.4} parent=35 // pred_fallthru
        _
      %v187 = vld [vmem:[%s2] sm:$0xff]
      %v188 = vld [vmem:[%s2 + $0x8] sm:$0xff]
      %v189 = vld [vmem:[%s2 + $0x10] sm:$0xff]
      %v190 = vld [vmem:[%s2 + $0x18] sm:$0xff]
      %v191 = vld [vmem:[%s179] sm:$0xff]
      %v192 = vld [vmem:[%s1] sm:$0xff]
      %v193 = vld [vmem:[%s1 + $0x8] sm:$0xff]
      %v194 = vld [vmem:[%s1 + $0x10] sm:$0xff]
      %v195 = vld [vmem:[%s1 + $0x18] sm:$0xff]
      %v196 = vld [vmem:[%s3] sm:$0x1]
      %v198 = vlaneseq
      %v199 = vshrl.u32 %v198, 7
      %v200 = vsub.s32 0, %v199
      %v201 = vrot.slane %v196, %v200
      %vm203 = vcmask 261120
      %v205 = vsel %vm203, %v191, 0
      %207 = vmatprep.subr.mxu0 0.0
      %208 = vmatpush1.msra.mxu0 %v192
      %209 = vmatprep.subr.mxu0 0.0
      %210 = vmatpush1.msra.mxu0 %v193
      %211 = vmatprep.subr.mxu0 0.0
      %212 = vmatpush1.msra.mxu0 %v194
      %213 = vmatprep.subr.mxu0 0.0
      %214 = vmatpush1.msra.mxu0 %v195
      %215 = vmatprep.subr.mxu0 0.0
      %216 = vmatpush1.msra.mxu0 0.0
      %217 = vmatprep.subr.mxu0 0.0
      %218 = vmatpush1.msra.mxu0 0.0
      %219 = vmatprep.subr.mxu0 0.0
      %220 = vmatpush1.msra.mxu0 0.0
      %221 = vmatprep.subr.mxu0 0.0
      %222 = vmatpush1.msra.mxu0 0.0
      %223 = vmatprep.subr.mxu0 0.0
      %224 = vmatpush1.msra.mxu0 0.0
      %225 = vmatprep.subr.mxu0 0.0
      %226 = vmatpush1.msra.mxu0 0.0
      %227 = vmatprep.subr.mxu0 0.0
      %228 = vmatpush1.msra.mxu0 0.0
      %229 = vmatprep.subr.mxu0 0.0
      %230 = vmatpush1.msra.mxu0 0.0
      %231 = vmatprep.subr.mxu0 0.0
      %232 = vmatpush1.msra.mxu0 0.0
      %233 = vmatprep.subr.mxu0 0.0
      %234 = vmatpush1.msra.mxu0 0.0
      %235 = vmatprep.subr.mxu0 0.0
      %236 = vmatpush1.msra.mxu0 0.0
      %237 = vmatprep.subr.mxu0 0.0
      %238 = vmatpush1.msra.mxu0 0.0
      %239 = vmatprep.subr.mxu0 0.0
      %240 = vmatpush1.msra.mxu0 0.0
      %241 = vmatprep.subr.mxu0 0.0
      %242 = vmatpush1.msra.mxu0 0.0
      %243 = vmatprep.subr.mxu0 0.0
      %244 = vmatpush1.msra.mxu0 0.0
      %245 = vmatprep.subr.mxu0 0.0
      %246 = vmatpush1.msra.mxu0 0.0
      %247 = vmatprep.subr.mxu0 0.0
      %248 = vmatpush1.msra.mxu0 0.0
      %249 = vmatprep.subr.mxu0 0.0
      %250 = vmatpush1.msra.mxu0 0.0
      %251 = vmatprep.subr.mxu0 0.0
      %252 = vmatpush1.msra.mxu0 0.0
      %253 = vmatprep.subr.mxu0 0.0
      %254 = vmatpush1.msra.mxu0 0.0
      %255 = vmatprep.subr.mxu0 0.0
      %256 = vmatpush1.msra.mxu0 0.0
      %257 = vmatprep.subr.mxu0 0.0
      %258 = vmatpush1.msra.mxu0 0.0
      %259 = vmatprep.subr.mxu0 0.0
      %260 = vmatpush1.msra.mxu0 0.0
      %261 = vmatprep.subr.mxu0 0.0
      %262 = vmatpush1.msra.mxu0 0.0
      %263 = vmatprep.subr.mxu0 0.0
      %264 = vmatpush1.msra.mxu0 0.0
      %265 = vmatprep.subr.mxu0 0.0
      %266 = vmatpush1.msra.mxu0 0.0
      %267 = vmatprep.subr.mxu0 0.0
      %268 = vmatpush1.msra.mxu0 0.0
      %269 = vmatprep.subr.mxu0 0.0
      %270 = vmatpush1.msra.mxu0 0.0
      %271 = vmatprep.mubr.f32.mxu0 0.0
      %272 = vmatmul.mubr.f32.gmra.mrb[0].mxu0 %v205
      %v273 = vpop.f32.mrb[0].mxu0
      %v274 = vadd.f32 %v201, %v273
      %v275 = vpop.f32.mrb[0].mxu0
      %276 = vdwg.mxu0
      %277 = vst [vmem:[#allocation4] sm:$0xff] %v274
      %v278 = vlaneseq
      %v279 = vand.u32 %v278, 127
      %vm280 = vcmp.ge.s32.totalorder %v279, 64
      %vm281 = vcmp.lt.s32.totalorder %v279, 96
      %vm282 = vmand %vm280, %vm281
      %v283 = vld [vmem:[#allocation2] sm:$0x3]
      %v284 = vld [vmem:[#allocation3] sm:$0x3]
      %v285 = vld [vmem:[#allocation4] sm:$0x3]
      %v287 = vsel %vm203, %v283, 0
      %289 = vmatprep.subr.mxu0 0.0
      %290 = vmatpush1.msra.mxu0 %v187
      %291 = vmatprep.subr.mxu0 0.0
      %292 = vmatpush1.msra.mxu0 %v188
      %293 = vmatprep.subr.mxu0 0.0
      %294 = vmatpush1.msra.mxu0 %v189
      %295 = vmatprep.subr.mxu0 0.0
      %296 = vmatpush1.msra.mxu0 %v190
      %297 = vmatprep.subr.mxu0 0.0
      %298 = vmatpush1.msra.mxu0 0.0
      %299 = vmatprep.subr.mxu0 0.0
      %300 = vmatpush1.msra.mxu0 0.0
      %301 = vmatprep.subr.mxu0 0.0
      %302 = vmatpush1.msra.mxu0 0.0
      %303 = vmatprep.subr.mxu0 0.0
      %304 = vmatpush1.msra.mxu0 0.0
      %305 = vmatprep.subr.mxu0 0.0
      %306 = vmatpush1.msra.mxu0 0.0
      %307 = vmatprep.subr.mxu0 0.0
      %308 = vmatpush1.msra.mxu0 0.0
      %309 = vmatprep.subr.mxu0 0.0
      %310 = vmatpush1.msra.mxu0 0.0
      %311 = vmatprep.subr.mxu0 0.0
      %312 = vmatpush1.msra.mxu0 0.0
      %313 = vmatprep.subr.mxu0 0.0
      %314 = vmatpush1.msra.mxu0 0.0
      %315 = vmatprep.subr.mxu0 0.0
      %316 = vmatpush1.msra.mxu0 0.0
      %317 = vmatprep.subr.mxu0 0.0
      %318 = vmatpush1.msra.mxu0 0.0
      %319 = vmatprep.subr.mxu0 0.0
      %320 = vmatpush1.msra.mxu0 0.0
      %321 = vmatprep.subr.mxu0 0.0
      %322 = vmatpush1.msra.mxu0 0.0
      %323 = vmatprep.subr.mxu0 0.0
      %324 = vmatpush1.msra.mxu0 0.0
      %325 = vmatprep.subr.mxu0 0.0
      %326 = vmatpush1.msra.mxu0 0.0
      %327 = vmatprep.subr.mxu0 0.0
      %328 = vmatpush1.msra.mxu0 0.0
      %329 = vmatprep.subr.mxu0 0.0
      %330 = vmatpush1.msra.mxu0 0.0
      %331 = vmatprep.subr.mxu0 0.0
      %332 = vmatpush1.msra.mxu0 0.0
      %333 = vmatprep.subr.mxu0 0.0
      %334 = vmatpush1.msra.mxu0 0.0
      %335 = vmatprep.subr.mxu0 0.0
      %336 = vmatpush1.msra.mxu0 0.0
      %337 = vmatprep.subr.mxu0 0.0
      %338 = vmatpush1.msra.mxu0 0.0
      %339 = vmatprep.subr.mxu0 0.0
      %340 = vmatpush1.msra.mxu0 0.0
      %341 = vmatprep.subr.mxu0 0.0
      %342 = vmatpush1.msra.mxu0 0.0
      %343 = vmatprep.subr.mxu0 0.0
      %344 = vmatpush1.msra.mxu0 0.0
      %345 = vmatprep.subr.mxu0 0.0
      %346 = vmatpush1.msra.mxu0 0.0
      %347 = vmatprep.subr.mxu0 0.0
      %348 = vmatpush1.msra.mxu0 0.0
      %349 = vmatprep.subr.mxu0 0.0
      %350 = vmatpush1.msra.mxu0 0.0
      %351 = vmatprep.subr.mxu0 0.0
      %352 = vmatpush1.msra.mxu0 0.0
      %353 = vmatprep.mubr.f32.mxu0 0.0
      %354 = vmatmul.mubr.f32.gmra.mrb[0].mxu0 %v287
      %v355 = vpop.f32.mrb[0].mxu0
      %v356 = vadd.f32 0.0, %v355
      %v357 = vpop.f32.mrb[0].mxu0
      %358 = vdwg.mxu0
      %v359 = vadd.f32 %v285, %v356
      %v360 = vtanh.pop %v359
      %v361 = vxor.u32 %v359, 2147483648
      %v362 = vmul.f32 %v361, 1.442695
      %v363 = vpow.pop %v362
      %v364 = vadd.f32 %v363, 1.0
      %v365 = vrcp.pop %v364
      %v366 = vmul.f32 1.0, %v365
      %v367 = vsel %vm282, %v360, %v366
      %369 = vrot.lane.b32.xlu0 %v284, 32
      %v370 = vpop.permute.xlu0 %369
      %v372 = vmul.f32 %v367, %v370
      %374 = vrot.lane.b32.xlu0 %v367, 64
      %v375 = vpop.permute.xlu0 %374
      %v377 = vmul.f32 %v367, %v375
      %379 = vrot.lane.b32.xlu0 %v377, 32
      %v380 = vpop.permute.xlu0 %379
      %v382 = vadd.f32 %v372, %v380
      %v383 = vtanh.pop %v382
      %385 = vrot.lane.b32.xlu0 %v383, 64
      %v386 = vpop.permute.xlu0 %385
      %v388 = vmul.f32 %v367, %v386
      %390 = vrot.lane.b32.xlu0 %v388, 32
      %v391 = vpop.permute.xlu0 %390
      %vm393 = vcmask 254976
      %394 = vst.msk [vmem:[#allocation2] sm:$0x3] %vm393, %v391
      %396 = vrot.lane.b32.xlu0 %v382, 96
      %v397 = vpop.permute.xlu0 %396
      %399 = vst.msk [vmem:[#allocation3] sm:$0x3] %vm393, %v397
      %v400 = vld [vmem:[#allocation2] sm:$0x3]
      %v401 = vld [vmem:[#allocation3] sm:$0x3]
      %v402 = vld [vmem:[#allocation4 + $0x2] sm:$0x3]
      %v404 = vsel %vm203, %v400, 0
      %406 = vmatprep.subr.mxu0 0.0
      %407 = vmatpush1.msra.mxu0 %v187
      %408 = vmatprep.subr.mxu0 0.0
      %409 = vmatpush1.msra.mxu0 %v188
      %410 = vmatprep.subr.mxu0 0.0
      %411 = vmatpush1.msra.mxu0 %v189
      %412 = vmatprep.subr.mxu0 0.0
      %413 = vmatpush1.msra.mxu0 %v190
      %414 = vmatprep.subr.mxu0 0.0
      %415 = vmatpush1.msra.mxu0 0.0
      %416 = vmatprep.subr.mxu0 0.0
      %417 = vmatpush1.msra.mxu0 0.0
      %418 = vmatprep.subr.mxu0 0.0
      %419 = vmatpush1.msra.mxu0 0.0
      %420 = vmatprep.subr.mxu0 0.0
      %421 = vmatpush1.msra.mxu0 0.0
      %422 = vmatprep.subr.mxu0 0.0
      %423 = vmatpush1.msra.mxu0 0.0
      %424 = vmatprep.subr.mxu0 0.0
      %425 = vmatpush1.msra.mxu0 0.0
      %426 = vmatprep.subr.mxu0 0.0
      %427 = vmatpush1.msra.mxu0 0.0
      %428 = vmatprep.subr.mxu0 0.0
      %429 = vmatpush1.msra.mxu0 0.0
      %430 = vmatprep.subr.mxu0 0.0
      %431 = vmatpush1.msra.mxu0 0.0
      %432 = vmatprep.subr.mxu0 0.0
      %433 = vmatpush1.msra.mxu0 0.0
      %434 = vmatprep.subr.mxu0 0.0
      %435 = vmatpush1.msra.mxu0 0.0
      %436 = vmatprep.subr.mxu0 0.0
      %437 = vmatpush1.msra.mxu0 0.0
      %438 = vmatprep.subr.mxu0 0.0
      %439 = vmatpush1.msra.mxu0 0.0
      %440 = vmatprep.subr.mxu0 0.0
      %441 = vmatpush1.msra.mxu0 0.0
      %442 = vmatprep.subr.mxu0 0.0
      %443 = vmatpush1.msra.mxu0 0.0
      %444 = vmatprep.subr.mxu0 0.0
      %445 = vmatpush1.msra.mxu0 0.0
      %446 = vmatprep.subr.mxu0 0.0
      %447 = vmatpush1.msra.mxu0 0.0
      %448 = vmatprep.subr.mxu0 0.0
      %449 = vmatpush1.msra.mxu0 0.0
      %450 = vmatprep.subr.mxu0 0.0
      %451 = vmatpush1.msra.mxu0 0.0
      %452 = vmatprep.subr.mxu0 0.0
      %453 = vmatpush1.msra.mxu0 0.0
      %454 = vmatprep.subr.mxu0 0.0
      %455 = vmatpush1.msra.mxu0 0.0
      %456 = vmatprep.subr.mxu0 0.0
      %457 = vmatpush1.msra.mxu0 0.0
      %458 = vmatprep.subr.mxu0 0.0
      %459 = vmatpush1.msra.mxu0 0.0
      %460 = vmatprep.subr.mxu0 0.0
      %461 = vmatpush1.msra.mxu0 0.0
      %462 = vmatprep.subr.mxu0 0.0
      %463 = vmatpush1.msra.mxu0 0.0
      %464 = vmatprep.subr.mxu0 0.0
      %465 = vmatpush1.msra.mxu0 0.0
      %466 = vmatprep.subr.mxu0 0.0
      %467 = vmatpush1.msra.mxu0 0.0
      %468 = vmatprep.subr.mxu0 0.0
      %469 = vmatpush1.msra.mxu0 0.0
      %470 = vmatprep.mubr.f32.mxu0 0.0
      %471 = vmatmul.mubr.f32.gmra.mrb[0].mxu0 %v404
      %v472 = vpop.f32.mrb[0].mxu0
      %v473 = vadd.f32 0.0, %v472
      %v474 = vpop.f32.mrb[0].mxu0
      %475 = vdwg.mxu0
      %v476 = vadd.f32 %v402, %v473
      %v477 = vtanh.pop %v476
      %v478 = vxor.u32 %v476, 2147483648
      %v479 = vmul.f32 %v478, 1.442695
      %v480 = vpow.pop %v479
      %v481 = vadd.f32 %v480, 1.0
      %v482 = vrcp.pop %v481
      %v483 = vmul.f32 1.0, %v482
      %v484 = vsel %vm282, %v477, %v483
      %486 = vrot.lane.b32.xlu0 %v401, 32
      %v487 = vpop.permute.xlu0 %486
      %v489 = vmul.f32 %v484, %v487
      %491 = vrot.lane.b32.xlu0 %v484, 64
      %v492 = vpop.permute.xlu0 %491
      %v494 = vmul.f32 %v484, %v492
      %496 = vrot.lane.b32.xlu0 %v494, 32
      %v497 = vpop.permute.xlu0 %496
      %v499 = vadd.f32 %v489, %v497
      %v500 = vtanh.pop %v499
      %502 = vrot.lane.b32.xlu0 %v500, 64
      %v503 = vpop.permute.xlu0 %502
      %v505 = vmul.f32 %v484, %v503
      %507 = vrot.lane.b32.xlu0 %v505, 32
      %v508 = vpop.permute.xlu0 %507
      %510 = vst.msk [vmem:[#allocation2] sm:$0x3] %vm393, %v508
      %512 = vrot.lane.b32.xlu0 %v499, 96
      %v513 = vpop.permute.xlu0 %512
      %515 = vst.msk [vmem:[#allocation3] sm:$0x3] %vm393, %v513
      %v516 = vld [vmem:[#allocation2] sm:$0x3]
      %v517 = vld [vmem:[#allocation3] sm:$0x3]
      %v518 = vld [vmem:[#allocation4 + $0x4] sm:$0x3]
      %v520 = vsel %vm203, %v516, 0
      %522 = vmatprep.subr.mxu0 0.0
      %523 = vmatpush1.msra.mxu0 %v187
      %524 = vmatprep.subr.mxu0 0.0
      %525 = vmatpush1.msra.mxu0 %v188
      %526 = vmatprep.subr.mxu0 0.0
      %527 = vmatpush1.msra.mxu0 %v189
      %528 = vmatprep.subr.mxu0 0.0
      %529 = vmatpush1.msra.mxu0 %v190
      %530 = vmatprep.subr.mxu0 0.0
      %531 = vmatpush1.msra.mxu0 0.0
      %532 = vmatprep.subr.mxu0 0.0
      %533 = vmatpush1.msra.mxu0 0.0
      %534 = vmatprep.subr.mxu0 0.0
      %535 = vmatpush1.msra.mxu0 0.0
      %536 = vmatprep.subr.mxu0 0.0
      %537 = vmatpush1.msra.mxu0 0.0
      %538 = vmatprep.subr.mxu0 0.0
      %539 = vmatpush1.msra.mxu0 0.0
      %540 = vmatprep.subr.mxu0 0.0
      %541 = vmatpush1.msra.mxu0 0.0
      %542 = vmatprep.subr.mxu0 0.0
      %543 = vmatpush1.msra.mxu0 0.0
      %544 = vmatprep.subr.mxu0 0.0
      %545 = vmatpush1.msra.mxu0 0.0
      %546 = vmatprep.subr.mxu0 0.0
      %547 = vmatpush1.msra.mxu0 0.0
      %548 = vmatprep.subr.mxu0 0.0
      %549 = vmatpush1.msra.mxu0 0.0
      %550 = vmatprep.subr.mxu0 0.0
      %551 = vmatpush1.msra.mxu0 0.0
      %552 = vmatprep.subr.mxu0 0.0
      %553 = vmatpush1.msra.mxu0 0.0
      %554 = vmatprep.subr.mxu0 0.0
      %555 = vmatpush1.msra.mxu0 0.0
      %556 = vmatprep.subr.mxu0 0.0
      %557 = vmatpush1.msra.mxu0 0.0
      %558 = vmatprep.subr.mxu0 0.0
      %559 = vmatpush1.msra.mxu0 0.0
      %560 = vmatprep.subr.mxu0 0.0
      %561 = vmatpush1.msra.mxu0 0.0
      %562 = vmatprep.subr.mxu0 0.0
      %563 = vmatpush1.msra.mxu0 0.0
      %564 = vmatprep.subr.mxu0 0.0
      %565 = vmatpush1.msra.mxu0 0.0
      %566 = vmatprep.subr.mxu0 0.0
      %567 = vmatpush1.msra.mxu0 0.0
      %568 = vmatprep.subr.mxu0 0.0
      %569 = vmatpush1.msra.mxu0 0.0
      %570 = vmatprep.subr.mxu0 0.0
      %571 = vmatpush1.msra.mxu0 0.0
      %572 = vmatprep.subr.mxu0 0.0
      %573 = vmatpush1.msra.mxu0 0.0
      %574 = vmatprep.subr.mxu0 0.0
      %575 = vmatpush1.msra.mxu0 0.0
      %576 = vmatprep.subr.mxu0 0.0
      %577 = vmatpush1.msra.mxu0 0.0
      %578 = vmatprep.subr.mxu0 0.0
      %579 = vmatpush1.msra.mxu0 0.0
      %580 = vmatprep.subr.mxu0 0.0
      %581 = vmatpush1.msra.mxu0 0.0
      %582 = vmatprep.subr.mxu0 0.0
      %583 = vmatpush1.msra.mxu0 0.0
      %584 = vmatprep.subr.mxu0 0.0
      %585 = vmatpush1.msra.mxu0 0.0
      %586 = vmatprep.mubr.f32.mxu0 0.0
      %587 = vmatmul.mubr.f32.gmra.mrb[0].mxu0 %v520
      %v588 = vpop.f32.mrb[0].mxu0
      %v589 = vadd.f32 0.0, %v588
      %v590 = vpop.f32.mrb[0].mxu0
      %591 = vdwg.mxu0
      %v592 = vadd.f32 %v518, %v589
      %v593 = vtanh.pop %v592
      %v594 = vxor.u32 %v592, 2147483648
      %v595 = vmul.f32 %v594, 1.442695
      %v596 = vpow.pop %v595
      %v597 = vadd.f32 %v596, 1.0
      %v598 = vrcp.pop %v597
      %v599 = vmul.f32 1.0, %v598
      %v600 = vsel %vm282, %v593, %v599
      %602 = vrot.lane.b32.xlu0 %v517, 32
      %v603 = vpop.permute.xlu0 %602
      %v605 = vmul.f32 %v600, %v603
      %607 = vrot.lane.b32.xlu0 %v600, 64
      %v608 = vpop.permute.xlu0 %607
      %v610 = vmul.f32 %v600, %v608
      %612 = vrot.lane.b32.xlu0 %v610, 32
      %v613 = vpop.permute.xlu0 %612
      %v615 = vadd.f32 %v605, %v613
      %v616 = vtanh.pop %v615
      %618 = vrot.lane.b32.xlu0 %v616, 64
      %v619 = vpop.permute.xlu0 %618
      %v621 = vmul.f32 %v600, %v619
      %623 = vrot.lane.b32.xlu0 %v621, 32
      %v624 = vpop.permute.xlu0 %623
      %626 = vst.msk [vmem:[#allocation2] sm:$0x3] %vm393, %v624
      %628 = vrot.lane.b32.xlu0 %v615, 96
      %v629 = vpop.permute.xlu0 %628
      %631 = vst.msk [vmem:[#allocation3] sm:$0x3] %vm393, %v629
      %v632 = vld [vmem:[#allocation2] sm:$0x3]
      %v633 = vld [vmem:[#allocation3] sm:$0x3]
      %v634 = vld [vmem:[#allocation4 + $0x6] sm:$0x3]
      %v636 = vsel %vm203, %v632, 0
      %638 = vmatprep.subr.mxu0 0.0
      %639 = vmatpush1.msra.mxu0 %v187
      %640 = vmatprep.subr.mxu0 0.0
      %641 = vmatpush1.msra.mxu0 %v188
      %642 = vmatprep.subr.mxu0 0.0
      %643 = vmatpush1.msra.mxu0 %v189
      %644 = vmatprep.subr.mxu0 0.0
      %645 = vmatpush1.msra.mxu0 %v190
      %646 = vmatprep.subr.mxu0 0.0
      %647 = vmatpush1.msra.mxu0 0.0
      %648 = vmatprep.subr.mxu0 0.0
      %649 = vmatpush1.msra.mxu0 0.0
      %650 = vmatprep.subr.mxu0 0.0
      %651 = vmatpush1.msra.mxu0 0.0
      %652 = vmatprep.subr.mxu0 0.0
      %653 = vmatpush1.msra.mxu0 0.0
      %654 = vmatprep.subr.mxu0 0.0
      %655 = vmatpush1.msra.mxu0 0.0
      %656 = vmatprep.subr.mxu0 0.0
      %657 = vmatpush1.msra.mxu0 0.0
      %658 = vmatprep.subr.mxu0 0.0
      %659 = vmatpush1.msra.mxu0 0.0
      %660 = vmatprep.subr.mxu0 0.0
      %661 = vmatpush1.msra.mxu0 0.0
      %662 = vmatprep.subr.mxu0 0.0
      %663 = vmatpush1.msra.mxu0 0.0
      %664 = vmatprep.subr.mxu0 0.0
      %665 = vmatpush1.msra.mxu0 0.0
      %666 = vmatprep.subr.mxu0 0.0
      %667 = vmatpush1.msra.mxu0 0.0
      %668 = vmatprep.subr.mxu0 0.0
      %669 = vmatpush1.msra.mxu0 0.0
      %670 = vmatprep.subr.mxu0 0.0
      %671 = vmatpush1.msra.mxu0 0.0
      %672 = vmatprep.subr.mxu0 0.0
      %673 = vmatpush1.msra.mxu0 0.0
      %674 = vmatprep.subr.mxu0 0.0
      %675 = vmatpush1.msra.mxu0 0.0
      %676 = vmatprep.subr.mxu0 0.0
      %677 = vmatpush1.msra.mxu0 0.0
      %678 = vmatprep.subr.mxu0 0.0
      %679 = vmatpush1.msra.mxu0 0.0
      %680 = vmatprep.subr.mxu0 0.0
      %681 = vmatpush1.msra.mxu0 0.0
      %682 = vmatprep.subr.mxu0 0.0
      %683 = vmatpush1.msra.mxu0 0.0
      %684 = vmatprep.subr.mxu0 0.0
      %685 = vmatpush1.msra.mxu0 0.0
      %686 = vmatprep.subr.mxu0 0.0
      %687 = vmatpush1.msra.mxu0 0.0
      %688 = vmatprep.subr.mxu0 0.0
      %689 = vmatpush1.msra.mxu0 0.0
      %690 = vmatprep.subr.mxu0 0.0
      %691 = vmatpush1.msra.mxu0 0.0
      %692 = vmatprep.subr.mxu0 0.0
      %693 = vmatpush1.msra.mxu0 0.0
      %694 = vmatprep.subr.mxu0 0.0
      %695 = vmatpush1.msra.mxu0 0.0
      %696 = vmatprep.subr.mxu0 0.0
      %697 = vmatpush1.msra.mxu0 0.0
      %698 = vmatprep.subr.mxu0 0.0
      %699 = vmatpush1.msra.mxu0 0.0
      %700 = vmatprep.subr.mxu0 0.0
      %701 = vmatpush1.msra.mxu0 0.0
      %702 = vmatprep.mubr.f32.mxu0 0.0
      %703 = vmatmul.mubr.f32.gmra.mrb[0].mxu0 %v636
      %v704 = vpop.f32.mrb[0].mxu0
      %v705 = vadd.f32 0.0, %v704
      %v706 = vpop.f32.mrb[0].mxu0
      %707 = vdwg.mxu0
      %v708 = vadd.f32 %v634, %v705
      %v709 = vtanh.pop %v708
      %v710 = vxor.u32 %v708, 2147483648
      %v711 = vmul.f32 %v710, 1.442695
      %v712 = vpow.pop %v711
      %v713 = vadd.f32 %v712, 1.0
      %v714 = vrcp.pop %v713
      %v715 = vmul.f32 1.0, %v714
      %v716 = vsel %vm282, %v709, %v715
      %718 = vrot.lane.b32.xlu0 %v633, 32
      %v719 = vpop.permute.xlu0 %718
      %v721 = vmul.f32 %v716, %v719
      %723 = vrot.lane.b32.xlu0 %v716, 64
      %v724 = vpop.permute.xlu0 %723
      %v726 = vmul.f32 %v716, %v724
      %728 = vrot.lane.b32.xlu0 %v726, 32
      %v729 = vpop.permute.xlu0 %728
      %v731 = vadd.f32 %v721, %v729
      %v732 = vtanh.pop %v731
      %734 = vrot.lane.b32.xlu0 %v732, 64
      %v735 = vpop.permute.xlu0 %734
      %v737 = vmul.f32 %v716, %v735
      %739 = vrot.lane.b32.xlu0 %v737, 32
      %v740 = vpop.permute.xlu0 %739
      %742 = vst.msk [vmem:[#allocation2] sm:$0x3] %vm393, %v740
      %744 = vrot.lane.b32.xlu0 %v731, 96
      %v745 = vpop.permute.xlu0 %744
      %747 = vst.msk [vmem:[#allocation3] sm:$0x3] %vm393, %v745
      %p748 = scmp.eq.s32.totalorder %s15, 1
      // Predicated region
      $region41: #{lstm_model_forward.4} parent=35 // pred_check
        %p749 = pneg %p748
      $region42: #{lstm_model_forward.4} parent=35 // pred_check_branch
        %751 = sbr.rel (%p749) target = $region44
      $region43: #{lstm_model_forward.4} parent=35 // pred_region
        %v752 = vld [vmem:[#allocation2] sm:$0x3]
        %753 = vst.msk [vmem:[%s4] sm:$0x3] %vm393, %v752
      $region44: #{lstm_model_forward.4} parent=35 // pred_fallthru
        _
      // Predicated region
      $region45: #{lstm_model_forward.4} parent=35 // pred_check
        %p754 = pneg %p117
      $region46: #{lstm_model_forward.4} parent=35 // pred_check_branch
        %756 = sbr.rel (%p754) target = $region48
      $region47: #{lstm_model_forward.4} parent=35 // pred_region
        _
      $region48: #{lstm_model_forward.4} parent=35 // pred_fallthru
        _
      // Predicated region
      $region49: #{lstm_model_forward.4} parent=35 // pred_check
        %p757 = pneg %p117
      $region50: #{lstm_model_forward.4} parent=35 // pred_check_branch
        %759 = sbr.rel (%p757) target = $region52
      $region51: #{lstm_model_forward.4} parent=35 // pred_region
        _
      $region52: #{lstm_model_forward.4} parent=35 // pred_fallthru
        _
    $region36: #{lstm_model_forward.4} parent=5 // pred_fallthru
      _
    %p760 = scmp.le.s32.totalorder 2, %s10
    // Predicated region
    $region53: #{lstm_model_forward.4} parent=5 // pred_check
      %p761 = pneg %p760
    $region54: #{lstm_model_forward.4} parent=5 // pred_check_branch
      %763 = sbr.rel (%p761) target = $region56
    $region55: #{lstm_model_forward.4} parent=5 // pred_region
      %s764 = ssub.s32 %s10, 2
    $region56: #{lstm_model_forward.4} parent=5 // pred_fallthru
      _
  $region6: #{lstm_model_forward.4} parent=0 // loop_footer
    %s14 = sadd.s32 1, %s10
  $region7: #{lstm_model_forward.4} parent=0 // loop_footer_branch
    %9 = sbr.rel target = $region3
  $region8: #{lstm_model_forward.4} parent=0 // loop_exit
    _

// kernel: lstm_model_forward.3
$region0: #{lstm_model_forward.3}
  #allocation0 [shape = 'u32[]', space=smem, size = 0x4, offset = 0x4, fixed_abs, tag = 'smem constant byte address 0x4 - core index']
  #allocation1 [shape = 'u32[144,128]{1,0:T(1,128)}', space=vmem, size = 0x12000, scoped, tag = 'internal scratch']
  #allocation2 [shape = 'f32[2,32]{1,0:T(2,128)}', space=vmem, size = 0x400, scoped, tag = 'scratch operand']
  #allocation3 [shape = 'f32[2,32]{1,0:T(2,128)}', space=vmem, size = 0x400, scoped, tag = 'scratch operand']
  #allocation4 [shape = 'f32[8,128]{1,0:T(8,128)}', space=vmem, size = 0x1000, scoped, tag = 'scratch operand']
  %s0 = inlined_call_operand.vmem [shape: f32[16,32], index: 0, kind: input, shape index: {}]
  %s1 = inlined_call_operand.vmem [shape: f32[32,128], index: 1, kind: input, shape index: {}]
  %s2 = inlined_call_operand.vmem [shape: f32[32,128], index: 2, kind: input, shape index: {}]
  %s3 = inlined_call_operand.vmem [shape: f32[1,128], index: 3, kind: input, shape index: {}]
  %s4 = inlined_call_operand.vmem [shape: f32[16,32], index: 4, kind: output, shape index: {}]
  %s5 = sld [smem:[#allocation0]]
  $region53: #{lstm_model_forward.3} parent=0
    _
  %s7 = ssub.s32 1, %s5
  %s8 = scalar_select 0, %s7, %s5
  loop: start=0, step=1, limit=4
  $region2: #{lstm_model_forward.3} parent=0 // loop_pre_header
    _
  $region3: #{lstm_model_forward.3} parent=0 // loop_header
    %s10 = sphi 0, %s14
    %p11 = scmp.ge.s32.totalorder %s10, 4
    %s20 = sphi 0, %s22
    %s23 = sphi 0, %s20
    %s24 = sphi 0, %s23
    %s40 = sphi 0, %s24
    %s44 = sphi 0, %s44
    %s46 = sphi 0, %s44
    %s47 = sphi 0, %s46
    %s61 = sphi 0, %s47
    %s65 = sphi 0, %s65
    %s67 = sphi 0, %s65
    %s68 = sphi 0, %s67
    %s82 = sphi 0, %s68
    %s86 = sphi 0, %s86
    %s88 = sphi 0, %s86
    %s89 = sphi 0, %s88
    %s103 = sphi 0, %s89
    %s109 = sphi 0, %s111
    %s112 = sphi 0, %s109
    %s113 = sphi 0, %s112
    %s129 = sphi 0, %s113
  $region4: #{lstm_model_forward.3} parent=0 // loop_header_branch
    %13 = sbr.rel (%p11) target = $region8
  $region5: #{lstm_model_forward.3} parent=0 // loop_body
    %s15 = ssub.s32 %s10, 1
    %s16 = ssub.s32 %s10, 2
    %s17 = sadd.s32 %s10, 1
    %s18 = ssub.s32 %s10, %s17
    %p19 = scmp.eq.s32.totalorder %s18, 0
    %s21 = sadd.s32 %s20, 1
    %s22 = scalar_select %p19, %s20, %s21
    %p25 = pneg %p19
    %p26 = scmp.eq.s32.totalorder %s10, 1
    %p27 = por %p25, %p26
    %p28 = scmp.ne.s32.totalorder %s20, %s23
    %p29 = scmp.eq.s32.totalorder %s10, 0
    %p30 = por %p28, %p29
    %p31 = scmp.ne.s32.totalorder %s20, %s23
    %p32 = scmp.eq.s32.totalorder %s15, 1
    %p33 = por %p31, %p32
    %p34 = scmp.ne.s32.totalorder %s23, %s24
    %p35 = scmp.eq.s32.totalorder %s15, 0
    %p36 = por %p34, %p35
    %p37 = scmp.ne.s32.totalorder %s23, %s24
    %p38 = scmp.eq.s32.totalorder %s16, 1
    %p39 = por %p37, %p38
    %p41 = scmp.ne.s32.totalorder %s24, %s40
    %p42 = scmp.eq.s32.totalorder %s16, 0
    %p43 = por %p41, %p42
    %s45 = sadd.s32 %s44, 1
    %p48 = scmp.eq.s32.totalorder %s10, 1
    %p49 = scmp.ne.s32.totalorder %s44, %s46
    %p50 = scmp.eq.s32.totalorder %s10, 0
    %p51 = por %p49, %p50
    %p52 = scmp.ne.s32.totalorder %s44, %s46
    %p53 = scmp.eq.s32.totalorder %s15, 1
    %p54 = por %p52, %p53
    %p55 = scmp.ne.s32.totalorder %s46, %s47
    %p56 = scmp.eq.s32.totalorder %s15, 0
    %p57 = por %p55, %p56
    %p58 = scmp.ne.s32.totalorder %s46, %s47
    %p59 = scmp.eq.s32.totalorder %s16, 1
    %p60 = por %p58, %p59
    %p62 = scmp.ne.s32.totalorder %s47, %s61
    %p63 = scmp.eq.s32.totalorder %s16, 0
    %p64 = por %p62, %p63
    %s66 = sadd.s32 %s65, 1
    %p69 = scmp.eq.s32.totalorder %s10, 1
    %p70 = scmp.ne.s32.totalorder %s65, %s67
    %p71 = scmp.eq.s32.totalorder %s10, 0
    %p72 = por %p70, %p71
    %p73 = scmp.ne.s32.totalorder %s65, %s67
    %p74 = scmp.eq.s32.totalorder %s15, 1
    %p75 = por %p73, %p74
    %p76 = scmp.ne.s32.totalorder %s67, %s68
    %p77 = scmp.eq.s32.totalorder %s15, 0
    %p78 = por %p76, %p77
    %p79 = scmp.ne.s32.totalorder %s67, %s68
    %p80 = scmp.eq.s32.totalorder %s16, 1
    %p81 = por %p79, %p80
    %p83 = scmp.ne.s32.totalorder %s68, %s82
    %p84 = scmp.eq.s32.totalorder %s16, 0
    %p85 = por %p83, %p84
    %s87 = sadd.s32 %s86, 1
    %p90 = scmp.eq.s32.totalorder %s10, 1
    %p91 = scmp.ne.s32.totalorder %s86, %s88
    %p92 = scmp.eq.s32.totalorder %s10, 0
    %p93 = por %p91, %p92
    %p94 = scmp.ne.s32.totalorder %s86, %s88
    %p95 = scmp.eq.s32.totalorder %s15, 1
    %p96 = por %p94, %p95
    %p97 = scmp.ne.s32.totalorder %s88, %s89
    %p98 = scmp.eq.s32.totalorder %s15, 0
    %p99 = por %p97, %p98
    %p100 = scmp.ne.s32.totalorder %s88, %s89
    %p101 = scmp.eq.s32.totalorder %s16, 1
    %p102 = por %p100, %p101
    %p104 = scmp.ne.s32.totalorder %s89, %s103
    %p105 = scmp.eq.s32.totalorder %s16, 0
    %p106 = por %p104, %p105
    %s107 = ssub.s32 %s10, %s17
    %p108 = scmp.eq.s32.totalorder %s107, 0
    %s110 = sadd.s32 %s109, 1
    %s111 = scalar_select %p108, %s109, %s110
    %p114 = pneg %p108
    %p115 = scmp.eq.s32.totalorder %s10, 1
    %p116 = por %p114, %p115
    %p117 = scmp.ne.s32.totalorder %s109, %s112
    %p118 = scmp.eq.s32.totalorder %s10, 0
    %p119 = por %p117, %p118
    %p120 = scmp.ne.s32.totalorder %s109, %s112
    %p121 = scmp.eq.s32.totalorder %s15, 1
    %p122 = por %p120, %p121
    %p123 = scmp.ne.s32.totalorder %s112, %s113
    %p124 = scmp.eq.s32.totalorder %s15, 0
    %p125 = por %p123, %p124
    %p126 = scmp.ne.s32.totalorder %s112, %s113
    %p127 = scmp.eq.s32.totalorder %s16, 1
    %p128 = por %p126, %p127
    %p130 = scmp.ne.s32.totalorder %s113, %s129
    %p131 = scmp.eq.s32.totalorder %s16, 0
    %p132 = por %p130, %p131
    %p133 = scmp.le.s32.totalorder 1, %s10
    %p134 = scmp.lt.s32.totalorder %s10, 3
    %p135 = pnand %p133, %p134
    %p136 = pneg %p135
    // Predicated region
    $region9: #{lstm_model_forward.3} parent=5 // pred_check
      _
    $region10: #{lstm_model_forward.3} parent=5 // pred_check_branch
      %138 = sbr.rel (%p135) target = $region12
    $region11: #{lstm_model_forward.3} parent=5 // pred_region
      %s139 = ssub.s32 %s10, 1
      // Predicated region
      $region13: #{lstm_model_forward.3} parent=11 // pred_check
        %p140 = pneg %p57
      $region14: #{lstm_model_forward.3} parent=11 // pred_check_branch
        %142 = sbr.rel (%p140) target = $region16
      $region15: #{lstm_model_forward.3} parent=11 // pred_region
        _
      $region16: #{lstm_model_forward.3} parent=11 // pred_fallthru
        _
      // Predicated region
      $region17: #{lstm_model_forward.3} parent=11 // pred_check
        %p143 = pneg %p78
      $region18: #{lstm_model_forward.3} parent=11 // pred_check_branch
        %145 = sbr.rel (%p143) target = $region20
      $region19: #{lstm_model_forward.3} parent=11 // pred_region
        _
      $region20: #{lstm_model_forward.3} parent=11 // pred_fallthru
        _
      // Predicated region
      $region21: #{lstm_model_forward.3} parent=11 // pred_check
        %p146 = pneg %p99
      $region22: #{lstm_model_forward.3} parent=11 // pred_check_branch
        %148 = sbr.rel (%p146) target = $region24
      $region23: #{lstm_model_forward.3} parent=11 // pred_region
        _
      $region24: #{lstm_model_forward.3} parent=11 // pred_fallthru
        _
    $region12: #{lstm_model_forward.3} parent=5 // pred_fallthru
      _
    %p149 = scmp.lt.s32.totalorder %s10, 2
    // Predicated region
    $region25: #{lstm_model_forward.3} parent=5 // pred_check
      %p150 = pneg %p149
    $region26: #{lstm_model_forward.3} parent=5 // pred_check_branch
      %152 = sbr.rel (%p150) target = $region28
    $region27: #{lstm_model_forward.3} parent=5 // pred_region
      // Predicated region
      $region29: #{lstm_model_forward.3} parent=27 // pred_check
        %p153 = pneg %p30
      $region30: #{lstm_model_forward.3} parent=27 // pred_check_branch
        %155 = sbr.rel (%p153) target = $region32
      $region31: #{lstm_model_forward.3} parent=27 // pred_region
        %p156 = scmp.lt.s32.totalorder %s10, 1
        %s157 = scalar_select %p156, %s10, 1
        %s158 = smul.addr %s157, 8
        %s159 = scalar_lea.vmem %s0, %s158
      $region32: #{lstm_model_forward.3} parent=27 // pred_fallthru
        _
    $region28: #{lstm_model_forward.3} parent=5 // pred_fallthru
      _
    %p160 = scmp.le.s32.totalorder 1, %s10
    %p161 = scmp.lt.s32.totalorder %s10, 3
    %p162 = pnand %p160, %p161
    %p163 = pneg %p162
    // Predicated region
    $region33: #{lstm_model_forward.3} parent=5 // pred_check
      _
    $region34: #{lstm_model_forward.3} parent=5 // pred_check_branch
      %165 = sbr.rel (%p162) target = $region36
    $region35: #{lstm_model_forward.3} parent=5 // pred_region
      %s166 = ssub.s32 %s10, 1
      %p167 = scmp.lt.s32.totalorder %s15, 1
      %s168 = scalar_select %p167, %s15, 1
      %s169 = smul.addr %s168, 8
      %s170 = scalar_lea.vmem %s0, %s169
      %p171 = pneg %p36
      %p172 = pneg %p33
      %p173 = pneg %p57
      %p174 = pneg %p54
      %p175 = pneg %p78
      %p176 = pneg %p75
      %p177 = pneg %p99
      %p178 = pneg %p96
      %p179 = pneg %p125
      %p180 = pneg %p122
      %p181 = scmp.lt.s32.totalorder %s15, 1
      %s182 = scalar_select %p181, %s15, 1
      %s183 = smul.addr %s182, 8
      %s184 = scalar_lea.vmem %s4, %s183
      %p185 = scmp.lt.s32.totalorder %s15, 1
      %s186 = scalar_select %p185, %s15, 1
      %s187 = smul.addr %s186, 8
      %s188 = scalar_lea.vmem %s0, %s187
      %p189 = scmp.lt.s32.totalorder %s15, 1
      %s190 = scalar_select %p189, %s15, 1
      %s191 = smul.addr %s190, 8
      %s192 = scalar_lea.vmem %s4, %s191
      %p193 = scmp.eq.s32.totalorder %s15, 0
      // Predicated region
      $region37: #{lstm_model_forward.3} parent=35 // pred_check
        %p194 = pneg %p193
      $region38: #{lstm_model_forward.3} parent=35 // pred_check_branch
        %196 = sbr.rel (%p194) target = $region40
      $region39: #{lstm_model_forward.3} parent=35 // pred_region
        %vm197 = vcmask 254976
        %198 = vst.msk [vmem:[#allocation2] sm:$0x3] %vm197, 0.0
        %199 = vst.msk [vmem:[#allocation3] sm:$0x3] %vm197, 0.0
      $region40: #{lstm_model_forward.3} parent=35 // pred_fallthru
        _
      %v200 = vld [vmem:[%s2] sm:$0xff]
      %v201 = vld [vmem:[%s2 + $0x8] sm:$0xff]
      %v202 = vld [vmem:[%s2 + $0x10] sm:$0xff]
      %v203 = vld [vmem:[%s2 + $0x18] sm:$0xff]
      %v204 = vld [vmem:[%s188] sm:$0xff]
      %v205 = vld [vmem:[%s1] sm:$0xff]
      %v206 = vld [vmem:[%s1 + $0x8] sm:$0xff]
      %v207 = vld [vmem:[%s1 + $0x10] sm:$0xff]
      %v208 = vld [vmem:[%s1 + $0x18] sm:$0xff]
      %v209 = vld [vmem:[%s3] sm:$0x1]
      %v211 = vlaneseq
      %v212 = vshrl.u32 %v211, 7
      %v213 = vsub.s32 0, %v212
      %v214 = vrot.slane %v209, %v213
      %vm216 = vcmask 261120
      %v218 = vsel %vm216, %v204, 0
      %220 = vmatprep.subr.mxu0 0.0
      %221 = vmatpush1.msra.mxu0 %v205
      %222 = vmatprep.subr.mxu0 0.0
      %223 = vmatpush1.msra.mxu0 %v206
      %224 = vmatprep.subr.mxu0 0.0
      %225 = vmatpush1.msra.mxu0 %v207
      %226 = vmatprep.subr.mxu0 0.0
      %227 = vmatpush1.msra.mxu0 %v208
      %228 = vmatprep.subr.mxu0 0.0
      %229 = vmatpush1.msra.mxu0 0.0
      %230 = vmatprep.subr.mxu0 0.0
      %231 = vmatpush1.msra.mxu0 0.0
      %232 = vmatprep.subr.mxu0 0.0
      %233 = vmatpush1.msra.mxu0 0.0
      %234 = vmatprep.subr.mxu0 0.0
      %235 = vmatpush1.msra.mxu0 0.0
      %236 = vmatprep.subr.mxu0 0.0
      %237 = vmatpush1.msra.mxu0 0.0
      %238 = vmatprep.subr.mxu0 0.0
      %239 = vmatpush1.msra.mxu0 0.0
      %240 = vmatprep.subr.mxu0 0.0
      %241 = vmatpush1.msra.mxu0 0.0
      %242 = vmatprep.subr.mxu0 0.0
      %243 = vmatpush1.msra.mxu0 0.0
      %244 = vmatprep.subr.mxu0 0.0
      %245 = vmatpush1.msra.mxu0 0.0
      %246 = vmatprep.subr.mxu0 0.0
      %247 = vmatpush1.msra.mxu0 0.0
      %248 = vmatprep.subr.mxu0 0.0
      %249 = vmatpush1.msra.mxu0 0.0
      %250 = vmatprep.subr.mxu0 0.0
      %251 = vmatpush1.msra.mxu0 0.0
      %252 = vmatprep.subr.mxu0 0.0
      %253 = vmatpush1.msra.mxu0 0.0
      %254 = vmatprep.subr.mxu0 0.0
      %255 = vmatpush1.msra.mxu0 0.0
      %256 = vmatprep.subr.mxu0 0.0
      %257 = vmatpush1.msra.mxu0 0.0
      %258 = vmatprep.subr.mxu0 0.0
      %259 = vmatpush1.msra.mxu0 0.0
      %260 = vmatprep.subr.mxu0 0.0
      %261 = vmatpush1.msra.mxu0 0.0
      %262 = vmatprep.subr.mxu0 0.0
      %263 = vmatpush1.msra.mxu0 0.0
      %264 = vmatprep.subr.mxu0 0.0
      %265 = vmatpush1.msra.mxu0 0.0
      %266 = vmatprep.subr.mxu0 0.0
      %267 = vmatpush1.msra.mxu0 0.0
      %268 = vmatprep.subr.mxu0 0.0
      %269 = vmatpush1.msra.mxu0 0.0
      %270 = vmatprep.subr.mxu0 0.0
      %271 = vmatpush1.msra.mxu0 0.0
      %272 = vmatprep.subr.mxu0 0.0
      %273 = vmatpush1.msra.mxu0 0.0
      %274 = vmatprep.subr.mxu0 0.0
      %275 = vmatpush1.msra.mxu0 0.0
      %276 = vmatprep.subr.mxu0 0.0
      %277 = vmatpush1.msra.mxu0 0.0
      %278 = vmatprep.subr.mxu0 0.0
      %279 = vmatpush1.msra.mxu0 0.0
      %280 = vmatprep.subr.mxu0 0.0
      %281 = vmatpush1.msra.mxu0 0.0
      %282 = vmatprep.subr.mxu0 0.0
      %283 = vmatpush1.msra.mxu0 0.0
      %284 = vmatprep.mubr.f32.mxu0 0.0
      %285 = vmatmul.mubr.f32.gmra.mrb[0].mxu0 %v218
      %v286 = vpop.f32.mrb[0].mxu0
      %v287 = vadd.f32 %v214, %v286
      %v288 = vpop.f32.mrb[0].mxu0
      %289 = vdwg.mxu0
      %290 = vst [vmem:[#allocation4] sm:$0xff] %v287
      %v291 = vlaneseq
      %v292 = vand.u32 %v291, 127
      %vm293 = vcmp.ge.s32.totalorder %v292, 64
      %vm294 = vcmp.lt.s32.totalorder %v292, 96
      %vm295 = vmand %vm293, %vm294
      %v296 = vld [vmem:[#allocation2] sm:$0x3]
      %v297 = vld [vmem:[#allocation3] sm:$0x3]
      %v298 = vld [vmem:[#allocation4] sm:$0x3]
      %v300 = vsel %vm216, %v296, 0
      %302 = vmatprep.subr.mxu0 0.0
      %303 = vmatpush1.msra.mxu0 %v200
      %304 = vmatprep.subr.mxu0 0.0
      %305 = vmatpush1.msra.mxu0 %v201
      %306 = vmatprep.subr.mxu0 0.0
      %307 = vmatpush1.msra.mxu0 %v202
      %308 = vmatprep.subr.mxu0 0.0
      %309 = vmatpush1.msra.mxu0 %v203
      %310 = vmatprep.subr.mxu0 0.0
      %311 = vmatpush1.msra.mxu0 0.0
      %312 = vmatprep.subr.mxu0 0.0
      %313 = vmatpush1.msra.mxu0 0.0
      %314 = vmatprep.subr.mxu0 0.0
      %315 = vmatpush1.msra.mxu0 0.0
      %316 = vmatprep.subr.mxu0 0.0
      %317 = vmatpush1.msra.mxu0 0.0
      %318 = vmatprep.subr.mxu0 0.0
      %319 = vmatpush1.msra.mxu0 0.0
      %320 = vmatprep.subr.mxu0 0.0
      %321 = vmatpush1.msra.mxu0 0.0
      %322 = vmatprep.subr.mxu0 0.0
      %323 = vmatpush1.msra.mxu0 0.0
      %324 = vmatprep.subr.mxu0 0.0
      %325 = vmatpush1.msra.mxu0 0.0
      %326 = vmatprep.subr.mxu0 0.0
      %327 = vmatpush1.msra.mxu0 0.0
      %328 = vmatprep.subr.mxu0 0.0
      %329 = vmatpush1.msra.mxu0 0.0
      %330 = vmatprep.subr.mxu0 0.0
      %331 = vmatpush1.msra.mxu0 0.0
      %332 = vmatprep.subr.mxu0 0.0
      %333 = vmatpush1.msra.mxu0 0.0
      %334 = vmatprep.subr.mxu0 0.0
      %335 = vmatpush1.msra.mxu0 0.0
      %336 = vmatprep.subr.mxu0 0.0
      %337 = vmatpush1.msra.mxu0 0.0
      %338 = vmatprep.subr.mxu0 0.0
      %339 = vmatpush1.msra.mxu0 0.0
      %340 = vmatprep.subr.mxu0 0.0
      %341 = vmatpush1.msra.mxu0 0.0
      %342 = vmatprep.subr.mxu0 0.0
      %343 = vmatpush1.msra.mxu0 0.0
      %344 = vmatprep.subr.mxu0 0.0
      %345 = vmatpush1.msra.mxu0 0.0
      %346 = vmatprep.subr.mxu0 0.0
      %347 = vmatpush1.msra.mxu0 0.0
      %348 = vmatprep.subr.mxu0 0.0
      %349 = vmatpush1.msra.mxu0 0.0
      %350 = vmatprep.subr.mxu0 0.0
      %351 = vmatpush1.msra.mxu0 0.0
      %352 = vmatprep.subr.mxu0 0.0
      %353 = vmatpush1.msra.mxu0 0.0
      %354 = vmatprep.subr.mxu0 0.0
      %355 = vmatpush1.msra.mxu0 0.0
      %356 = vmatprep.subr.mxu0 0.0
      %357 = vmatpush1.msra.mxu0 0.0
      %358 = vmatprep.subr.mxu0 0.0
      %359 = vmatpush1.msra.mxu0 0.0
      %360 = vmatprep.subr.mxu0 0.0
      %361 = vmatpush1.msra.mxu0 0.0
      %362 = vmatprep.subr.mxu0 0.0
      %363 = vmatpush1.msra.mxu0 0.0
      %364 = vmatprep.subr.mxu0 0.0
      %365 = vmatpush1.msra.mxu0 0.0
      %366 = vmatprep.mubr.f32.mxu0 0.0
      %367 = vmatmul.mubr.f32.gmra.mrb[0].mxu0 %v300
      %v368 = vpop.f32.mrb[0].mxu0
      %v369 = vadd.f32 0.0, %v368
      %v370 = vpop.f32.mrb[0].mxu0
      %371 = vdwg.mxu0
      %v372 = vadd.f32 %v298, %v369
      %v373 = vtanh.pop %v372
      %v374 = vxor.u32 %v372, 2147483648
      %v375 = vmul.f32 %v374, 1.442695
      %v376 = vpow.pop %v375
      %v377 = vadd.f32 %v376, 1.0
      %v378 = vrcp.pop %v377
      %v379 = vmul.f32 1.0, %v378
      %v380 = vsel %vm295, %v373, %v379
      %382 = vrot.lane.b32.xlu0 %v297, 32
      %v383 = vpop.permute.xlu0 %382
      %v385 = vmul.f32 %v380, %v383
      %387 = vrot.lane.b32.xlu0 %v380, 64
      %v388 = vpop.permute.xlu0 %387
      %v390 = vmul.f32 %v380, %v388
      %392 = vrot.lane.b32.xlu0 %v390, 32
      %v393 = vpop.permute.xlu0 %392
      %v395 = vadd.f32 %v385, %v393
      %v396 = vtanh.pop %v395
      %398 = vrot.lane.b32.xlu0 %v396, 64
      %v399 = vpop.permute.xlu0 %398
      %v401 = vmul.f32 %v380, %v399
      %403 = vrot.lane.b32.xlu0 %v401, 32
      %v404 = vpop.permute.xlu0 %403
      %vm406 = vcmask 254976
      %407 = vst.msk [vmem:[#allocation2] sm:$0x3] %vm406, %v404
      %409 = vrot.lane.b32.xlu0 %v395, 96
      %v410 = vpop.permute.xlu0 %409
      %412 = vst.msk [vmem:[#allocation3] sm:$0x3] %vm406, %v410
      %413 = vst.msk [vmem:[%s192] sm:$0x3] %vm406, %v404
      %v414 = vld [vmem:[#allocation2] sm:$0x3]
      %v415 = vld [vmem:[#allocation3] sm:$0x3]
      %v416 = vld [vmem:[#allocation4 + $0x2] sm:$0x3]
      %v418 = vsel %vm216, %v414, 0
      %420 = vmatprep.subr.mxu0 0.0
      %421 = vmatpush1.msra.mxu0 %v200
      %422 = vmatprep.subr.mxu0 0.0
      %423 = vmatpush1.msra.mxu0 %v201
      %424 = vmatprep.subr.mxu0 0.0
      %425 = vmatpush1.msra.mxu0 %v202
      %426 = vmatprep.subr.mxu0 0.0
      %427 = vmatpush1.msra.mxu0 %v203
      %428 = vmatprep.subr.mxu0 0.0
      %429 = vmatpush1.msra.mxu0 0.0
      %430 = vmatprep.subr.mxu0 0.0
      %431 = vmatpush1.msra.mxu0 0.0
      %432 = vmatprep.subr.mxu0 0.0
      %433 = vmatpush1.msra.mxu0 0.0
      %434 = vmatprep.subr.mxu0 0.0
      %435 = vmatpush1.msra.mxu0 0.0
      %436 = vmatprep.subr.mxu0 0.0
      %437 = vmatpush1.msra.mxu0 0.0
      %438 = vmatprep.subr.mxu0 0.0
      %439 = vmatpush1.msra.mxu0 0.0
      %440 = vmatprep.subr.mxu0 0.0
      %441 = vmatpush1.msra.mxu0 0.0
      %442 = vmatprep.subr.mxu0 0.0
      %443 = vmatpush1.msra.mxu0 0.0
      %444 = vmatprep.subr.mxu0 0.0
      %445 = vmatpush1.msra.mxu0 0.0
      %446 = vmatprep.subr.mxu0 0.0
      %447 = vmatpush1.msra.mxu0 0.0
      %448 = vmatprep.subr.mxu0 0.0
      %449 = vmatpush1.msra.mxu0 0.0
      %450 = vmatprep.subr.mxu0 0.0
      %451 = vmatpush1.msra.mxu0 0.0
      %452 = vmatprep.subr.mxu0 0.0
      %453 = vmatpush1.msra.mxu0 0.0
      %454 = vmatprep.subr.mxu0 0.0
      %455 = vmatpush1.msra.mxu0 0.0
      %456 = vmatprep.subr.mxu0 0.0
      %457 = vmatpush1.msra.mxu0 0.0
      %458 = vmatprep.subr.mxu0 0.0
      %459 = vmatpush1.msra.mxu0 0.0
      %460 = vmatprep.subr.mxu0 0.0
      %461 = vmatpush1.msra.mxu0 0.0
      %462 = vmatprep.subr.mxu0 0.0
      %463 = vmatpush1.msra.mxu0 0.0
      %464 = vmatprep.subr.mxu0 0.0
      %465 = vmatpush1.msra.mxu0 0.0
      %466 = vmatprep.subr.mxu0 0.0
      %467 = vmatpush1.msra.mxu0 0.0
      %468 = vmatprep.subr.mxu0 0.0
      %469 = vmatpush1.msra.mxu0 0.0
      %470 = vmatprep.subr.mxu0 0.0
      %471 = vmatpush1.msra.mxu0 0.0
      %472 = vmatprep.subr.mxu0 0.0
      %473 = vmatpush1.msra.mxu0 0.0
      %474 = vmatprep.subr.mxu0 0.0
      %475 = vmatpush1.msra.mxu0 0.0
      %476 = vmatprep.subr.mxu0 0.0
      %477 = vmatpush1.msra.mxu0 0.0
      %478 = vmatprep.subr.mxu0 0.0
      %479 = vmatpush1.msra.mxu0 0.0
      %480 = vmatprep.subr.mxu0 0.0
      %481 = vmatpush1.msra.mxu0 0.0
      %482 = vmatprep.subr.mxu0 0.0
      %483 = vmatpush1.msra.mxu0 0.0
      %484 = vmatprep.mubr.f32.mxu0 0.0
      %485 = vmatmul.mubr.f32.gmra.mrb[0].mxu0 %v418
      %v486 = vpop.f32.mrb[0].mxu0
      %v487 = vadd.f32 0.0, %v486
      %v488 = vpop.f32.mrb[0].mxu0
      %489 = vdwg.mxu0
      %v490 = vadd.f32 %v416, %v487
      %v491 = vtanh.pop %v490
      %v492 = vxor.u32 %v490, 2147483648
      %v493 = vmul.f32 %v492, 1.442695
      %v494 = vpow.pop %v493
      %v495 = vadd.f32 %v494, 1.0
      %v496 = vrcp.pop %v495
      %v497 = vmul.f32 1.0, %v496
      %v498 = vsel %vm295, %v491, %v497
      %500 = vrot.lane.b32.xlu0 %v415, 32
      %v501 = vpop.permute.xlu0 %500
      %v503 = vmul.f32 %v498, %v501
      %505 = vrot.lane.b32.xlu0 %v498, 64
      %v506 = vpop.permute.xlu0 %505
      %v508 = vmul.f32 %v498, %v506
      %510 = vrot.lane.b32.xlu0 %v508, 32
      %v511 = vpop.permute.xlu0 %510
      %v513 = vadd.f32 %v503, %v511
      %v514 = vtanh.pop %v513
      %516 = vrot.lane.b32.xlu0 %v514, 64
      %v517 = vpop.permute.xlu0 %516
      %v519 = vmul.f32 %v498, %v517
      %521 = vrot.lane.b32.xlu0 %v519, 32
      %v522 = vpop.permute.xlu0 %521
      %524 = vst.msk [vmem:[#allocation2] sm:$0x3] %vm406, %v522
      %526 = vrot.lane.b32.xlu0 %v513, 96
      %v527 = vpop.permute.xlu0 %526
      %529 = vst.msk [vmem:[#allocation3] sm:$0x3] %vm406, %v527
      %530 = vst.msk [vmem:[%s192 + $0x2] sm:$0x3] %vm406, %v522
      %v531 = vld [vmem:[#allocation2] sm:$0x3]
      %v532 = vld [vmem:[#allocation3] sm:$0x3]
      %v533 = vld [vmem:[#allocation4 + $0x4] sm:$0x3]
      %v535 = vsel %vm216, %v531, 0
      %537 = vmatprep.subr.mxu0 0.0
      %538 = vmatpush1.msra.mxu0 %v200
      %539 = vmatprep.subr.mxu0 0.0
      %540 = vmatpush1.msra.mxu0 %v201
      %541 = vmatprep.subr.mxu0 0.0
      %542 = vmatpush1.msra.mxu0 %v202
      %543 = vmatprep.subr.mxu0 0.0
      %544 = vmatpush1.msra.mxu0 %v203
      %545 = vmatprep.subr.mxu0 0.0
      %546 = vmatpush1.msra.mxu0 0.0
      %547 = vmatprep.subr.mxu0 0.0
      %548 = vmatpush1.msra.mxu0 0.0
      %549 = vmatprep.subr.mxu0 0.0
      %550 = vmatpush1.msra.mxu0 0.0
      %551 = vmatprep.subr.mxu0 0.0
      %552 = vmatpush1.msra.mxu0 0.0
      %553 = vmatprep.subr.mxu0 0.0
      %554 = vmatpush1.msra.mxu0 0.0
      %555 = vmatprep.subr.mxu0 0.0
      %556 = vmatpush1.msra.mxu0 0.0
      %557 = vmatprep.subr.mxu0 0.0
      %558 = vmatpush1.msra.mxu0 0.0
      %559 = vmatprep.subr.mxu0 0.0
      %560 = vmatpush1.msra.mxu0 0.0
      %561 = vmatprep.subr.mxu0 0.0
      %562 = vmatpush1.msra.mxu0 0.0
      %563 = vmatprep.subr.mxu0 0.0
      %564 = vmatpush1.msra.mxu0 0.0
      %565 = vmatprep.subr.mxu0 0.0
      %566 = vmatpush1.msra.mxu0 0.0
      %567 = vmatprep.subr.mxu0 0.0
      %568 = vmatpush1.msra.mxu0 0.0
      %569 = vmatprep.subr.mxu0 0.0
      %570 = vmatpush1.msra.mxu0 0.0
      %571 = vmatprep.subr.mxu0 0.0
      %572 = vmatpush1.msra.mxu0 0.0
      %573 = vmatprep.subr.mxu0 0.0
      %574 = vmatpush1.msra.mxu0 0.0
      %575 = vmatprep.subr.mxu0 0.0
      %576 = vmatpush1.msra.mxu0 0.0
      %577 = vmatprep.subr.mxu0 0.0
      %578 = vmatpush1.msra.mxu0 0.0
      %579 = vmatprep.subr.mxu0 0.0
      %580 = vmatpush1.msra.mxu0 0.0
      %581 = vmatprep.subr.mxu0 0.0
      %582 = vmatpush1.msra.mxu0 0.0
      %583 = vmatprep.subr.mxu0 0.0
      %584 = vmatpush1.msra.mxu0 0.0
      %585 = vmatprep.subr.mxu0 0.0
      %586 = vmatpush1.msra.mxu0 0.0
      %587 = vmatprep.subr.mxu0 0.0
      %588 = vmatpush1.msra.mxu0 0.0
      %589 = vmatprep.subr.mxu0 0.0
      %590 = vmatpush1.msra.mxu0 0.0
      %591 = vmatprep.subr.mxu0 0.0
      %592 = vmatpush1.msra.mxu0 0.0
      %593 = vmatprep.subr.mxu0 0.0
      %594 = vmatpush1.msra.mxu0 0.0
      %595 = vmatprep.subr.mxu0 0.0
      %596 = vmatpush1.msra.mxu0 0.0
      %597 = vmatprep.subr.mxu0 0.0
      %598 = vmatpush1.msra.mxu0 0.0
      %599 = vmatprep.subr.mxu0 0.0
      %600 = vmatpush1.msra.mxu0 0.0
      %601 = vmatprep.mubr.f32.mxu0 0.0
      %602 = vmatmul.mubr.f32.gmra.mrb[0].mxu0 %v535
      %v603 = vpop.f32.mrb[0].mxu0
      %v604 = vadd.f32 0.0, %v603
      %v605 = vpop.f32.mrb[0].mxu0
      %606 = vdwg.mxu0
      %v607 = vadd.f32 %v533, %v604
      %v608 = vtanh.pop %v607
      %v609 = vxor.u32 %v607, 2147483648
      %v610 = vmul.f32 %v609, 1.442695
      %v611 = vpow.pop %v610
      %v612 = vadd.f32 %v611, 1.0
      %v613 = vrcp.pop %v612
      %v614 = vmul.f32 1.0, %v613
      %v615 = vsel %vm295, %v608, %v614
      %617 = vrot.lane.b32.xlu0 %v532, 32
      %v618 = vpop.permute.xlu0 %617
      %v620 = vmul.f32 %v615, %v618
      %622 = vrot.lane.b32.xlu0 %v615, 64
      %v623 = vpop.permute.xlu0 %622
      %v625 = vmul.f32 %v615, %v623
      %627 = vrot.lane.b32.xlu0 %v625, 32
      %v628 = vpop.permute.xlu0 %627
      %v630 = vadd.f32 %v620, %v628
      %v631 = vtanh.pop %v630
      %633 = vrot.lane.b32.xlu0 %v631, 64
      %v634 = vpop.permute.xlu0 %633
      %v636 = vmul.f32 %v615, %v634
      %638 = vrot.lane.b32.xlu0 %v636, 32
      %v639 = vpop.permute.xlu0 %638
      %641 = vst.msk [vmem:[#allocation2] sm:$0x3] %vm406, %v639
      %643 = vrot.lane.b32.xlu0 %v630, 96
      %v644 = vpop.permute.xlu0 %643
      %646 = vst.msk [vmem:[#allocation3] sm:$0x3] %vm406, %v644
      %647 = vst.msk [vmem:[%s192 + $0x4] sm:$0x3] %vm406, %v639
      %v648 = vld [vmem:[#allocation2] sm:$0x3]
      %v649 = vld [vmem:[#allocation3] sm:$0x3]
      %v650 = vld [vmem:[#allocation4 + $0x6] sm:$0x3]
      %v652 = vsel %vm216, %v648, 0
      %654 = vmatprep.subr.mxu0 0.0
      %655 = vmatpush1.msra.mxu0 %v200
      %656 = vmatprep.subr.mxu0 0.0
      %657 = vmatpush1.msra.mxu0 %v201
      %658 = vmatprep.subr.mxu0 0.0
      %659 = vmatpush1.msra.mxu0 %v202
      %660 = vmatprep.subr.mxu0 0.0
      %661 = vmatpush1.msra.mxu0 %v203
      %662 = vmatprep.subr.mxu0 0.0
      %663 = vmatpush1.msra.mxu0 0.0
      %664 = vmatprep.subr.mxu0 0.0
      %665 = vmatpush1.msra.mxu0 0.0
      %666 = vmatprep.subr.mxu0 0.0
      %667 = vmatpush1.msra.mxu0 0.0
      %668 = vmatprep.subr.mxu0 0.0
      %669 = vmatpush1.msra.mxu0 0.0
      %670 = vmatprep.subr.mxu0 0.0
      %671 = vmatpush1.msra.mxu0 0.0
      %672 = vmatprep.subr.mxu0 0.0
      %673 = vmatpush1.msra.mxu0 0.0
      %674 = vmatprep.subr.mxu0 0.0
      %675 = vmatpush1.msra.mxu0 0.0
      %676 = vmatprep.subr.mxu0 0.0
      %677 = vmatpush1.msra.mxu0 0.0
      %678 = vmatprep.subr.mxu0 0.0
      %679 = vmatpush1.msra.mxu0 0.0
      %680 = vmatprep.subr.mxu0 0.0
      %681 = vmatpush1.msra.mxu0 0.0
      %682 = vmatprep.subr.mxu0 0.0
      %683 = vmatpush1.msra.mxu0 0.0
      %684 = vmatprep.subr.mxu0 0.0
      %685 = vmatpush1.msra.mxu0 0.0
      %686 = vmatprep.subr.mxu0 0.0
      %687 = vmatpush1.msra.mxu0 0.0
      %688 = vmatprep.subr.mxu0 0.0
      %689 = vmatpush1.msra.mxu0 0.0
      %690 = vmatprep.subr.mxu0 0.0
      %691 = vmatpush1.msra.mxu0 0.0
      %692 = vmatprep.subr.mxu0 0.0
      %693 = vmatpush1.msra.mxu0 0.0
      %694 = vmatprep.subr.mxu0 0.0
      %695 = vmatpush1.msra.mxu0 0.0
      %696 = vmatprep.subr.mxu0 0.0
      %697 = vmatpush1.msra.mxu0 0.0
      %698 = vmatprep.subr.mxu0 0.0
      %699 = vmatpush1.msra.mxu0 0.0
      %700 = vmatprep.subr.mxu0 0.0
      %701 = vmatpush1.msra.mxu0 0.0
      %702 = vmatprep.subr.mxu0 0.0
      %703 = vmatpush1.msra.mxu0 0.0
      %704 = vmatprep.subr.mxu0 0.0
      %705 = vmatpush1.msra.mxu0 0.0
      %706 = vmatprep.subr.mxu0 0.0
      %707 = vmatpush1.msra.mxu0 0.0
      %708 = vmatprep.subr.mxu0 0.0
      %709 = vmatpush1.msra.mxu0 0.0
      %710 = vmatprep.subr.mxu0 0.0
      %711 = vmatpush1.msra.mxu0 0.0
      %712 = vmatprep.subr.mxu0 0.0
      %713 = vmatpush1.msra.mxu0 0.0
      %714 = vmatprep.subr.mxu0 0.0
      %715 = vmatpush1.msra.mxu0 0.0
      %716 = vmatprep.subr.mxu0 0.0
      %717 = vmatpush1.msra.mxu0 0.0
      %718 = vmatprep.mubr.f32.mxu0 0.0
      %719 = vmatmul.mubr.f32.gmra.mrb[0].mxu0 %v652
      %v720 = vpop.f32.mrb[0].mxu0
      %v721 = vadd.f32 0.0, %v720
      %v722 = vpop.f32.mrb[0].mxu0
      %723 = vdwg.mxu0
      %v724 = vadd.f32 %v650, %v721
      %v725 = vtanh.pop %v724
      %v726 = vxor.u32 %v724, 2147483648
      %v727 = vmul.f32 %v726, 1.442695
      %v728 = vpow.pop %v727
      %v729 = vadd.f32 %v728, 1.0
      %v730 = vrcp.pop %v729
      %v731 = vmul.f32 1.0, %v730
      %v732 = vsel %vm295, %v725, %v731
      %734 = vrot.lane.b32.xlu0 %v649, 32
      %v735 = vpop.permute.xlu0 %734
      %v737 = vmul.f32 %v732, %v735
      %739 = vrot.lane.b32.xlu0 %v732, 64
      %v740 = vpop.permute.xlu0 %739
      %v742 = vmul.f32 %v732, %v740
      %744 = vrot.lane.b32.xlu0 %v742, 32
      %v745 = vpop.permute.xlu0 %744
      %v747 = vadd.f32 %v737, %v745
      %v748 = vtanh.pop %v747
      %750 = vrot.lane.b32.xlu0 %v748, 64
      %v751 = vpop.permute.xlu0 %750
      %v753 = vmul.f32 %v732, %v751
      %755 = vrot.lane.b32.xlu0 %v753, 32
      %v756 = vpop.permute.xlu0 %755
      %758 = vst.msk [vmem:[#allocation2] sm:$0x3] %vm406, %v756
      %760 = vrot.lane.b32.xlu0 %v747, 96
      %v761 = vpop.permute.xlu0 %760
      %763 = vst.msk [vmem:[#allocation3] sm:$0x3] %vm406, %v761
      %764 = vst.msk [vmem:[%s192 + $0x6] sm:$0x3] %vm406, %v756
      %p765 = scmp.lt.s32.totalorder %s15, 1
      %s766 = scalar_select %p765, %s15, 1
      %s767 = smul.addr %s766, 8
      %s768 = scalar_lea.vmem %s4, %s767
      // Predicated region
      $region41: #{lstm_model_forward.3} parent=35 // pred_check
        %p769 = pneg %p122
      $region42: #{lstm_model_forward.3} parent=35 // pred_check_branch
        %771 = sbr.rel (%p769) target = $region44
      $region43: #{lstm_model_forward.3} parent=35 // pred_region
        _
      $region44: #{lstm_model_forward.3} parent=35 // pred_fallthru
        _
    $region36: #{lstm_model_forward.3} parent=5 // pred_fallthru
      _
    %p772 = scmp.le.s32.totalorder 2, %s10
    // Predicated region
    $region45: #{lstm_model_forward.3} parent=5 // pred_check
      %p773 = pneg %p772
    $region46: #{lstm_model_forward.3} parent=5 // pred_check_branch
      %775 = sbr.rel (%p773) target = $region48
    $region47: #{lstm_model_forward.3} parent=5 // pred_region
      %s776 = ssub.s32 %s10, 2
      // Predicated region
      $region49: #{lstm_model_forward.3} parent=47 // pred_check
        %p777 = pneg %p128
      $region50: #{lstm_model_forward.3} parent=47 // pred_check_branch
        %779 = sbr.rel (%p777) target = $region52
      $region51: #{lstm_model_forward.3} parent=47 // pred_region
        %p780 = scmp.lt.s32.totalorder %s16, 1
        %s781 = scalar_select %p780, %s16, 1
        %s782 = smul.addr %s781, 8
        %s783 = scalar_lea.vmem %s4, %s782
      $region52: #{lstm_model_forward.3} parent=47 // pred_fallthru
        _
    $region48: #{lstm_model_forward.3} parent=5 // pred_fallthru
      _
  $region6: #{lstm_model_forward.3} parent=0 // loop_footer
    %s14 = sadd.s32 1, %s10
  $region7: #{lstm_model_forward.3} parent=0 // loop_footer_branch
    %9 = sbr.rel target = $region3
  $region8: #{lstm_model_forward.3} parent=0 // loop_exit
    _

</llo_original>
